<compile_context>
chip_gen: v7x
topology: tpu7x:2x2x1
jax: 0.10.0
libtpu: 0.0.40
codegen_flags: <defaults>
</compile_context>

<pallas_src>
import math

import numpy as np
import jax
import jax.numpy as jnp
from jax import lax
from jax.experimental import pallas as pl
from jax.experimental.pallas import tpu as pltpu


# ---------------------------------------------------------------------------
# static weight-matrix construction (glue, plain numpy)
# ---------------------------------------------------------------------------
def _normalized_coords(iscope, oscope):
    """torch.arange(omin + ostep/2, omax, ostep) normalized to [-1, 1]."""
    imin, imax, _ = iscope
    omin, omax, ostep = oscope
    v = np.arange(omin + ostep / 2.0, omax, ostep, dtype=np.float64)
    return (v - imin) / (imax - imin) * 2.0 - 1.0


def _grid_sample_matrix(coords_norm, in_size):
    """Bilinear grid_sample weights (align_corners=False, zero padding)."""
    pos = ((coords_norm + 1.0) * in_size - 1.0) / 2.0
    i0 = np.floor(pos).astype(np.int64)
    w1 = pos - i0
    w0 = 1.0 - w1
    cols = np.arange(in_size)
    # out-of-range indices never match a column -> weight dropped == zero padding
    m = (w0[:, None] * (cols[None, :] == i0[:, None]) +
         w1[:, None] * (cols[None, :] == (i0 + 1)[:, None]))
    return m.astype(np.float32)


def _resize_matrix(in_size, scale):
    """Bilinear F.interpolate weights (align_corners=False, edge clamp)."""
    # TODO(synk): PyTorch's recompute_scale_factor corner cases for non-integer
    # scale factors are not modeled; src = (dst + 0.5)/scale - 0.5 (default path).
    out_size = int(math.floor(in_size * scale))
    dst = np.arange(out_size, dtype=np.float64)
    src = np.maximum((dst + 0.5) / scale - 0.5, 0.0)
    i0 = np.minimum(np.floor(src).astype(np.int64), in_size - 1)
    i1 = np.minimum(i0 + 1, in_size - 1)
    w1 = src - i0
    w0 = 1.0 - w1
    cols = np.arange(in_size)
    m = (w0[:, None] * (cols[None, :] == i0[:, None]) +
         w1[:, None] * (cols[None, :] == i1[:, None]))
    return m.astype(np.float32)


# ---------------------------------------------------------------------------
# VMEM budget / batch-tile planning
# ---------------------------------------------------------------------------
def _physical_vmem_bytes():
    try:
        return int(pltpu.get_tpu_info().vmem_capacity_bytes)
    except Exception:
        return 64 << 20            # conservative (v7x-sized) fallback


def _vmem_budget_bytes(physical):
    # ~50% of physical VMEM: 64 MiB on v5e/v6e (128 MiB), 32 MiB on v7x (64 MiB).
    return int(min(physical // 2, 96 << 20))


def _plan_batch_tile(B, bytes_in, bytes_out, fixed_bytes, vmem_budget,
                     target_block_bytes=2 << 20, max_tb=None):
    """Pick the batch-tile size TB and the grid length.

    TB is sized so that (a) double-buffered input+output blocks plus resident
    weights / per-step temporaries fit the per-generation VMEM budget, and
    (b) the streamed input block is a few MiB (amortizes the ~0.35us/grid-step
    overhead and keeps DMAs long).  Divisors of B are preferred; when B has no
    usable divisor (e.g. prime) a ragged last tile is used (Pallas drops the
    out-of-range writes) instead of collapsing to TB=1.
    """
    per_map = 2 * (bytes_in + bytes_out)              # double-buffered in + out
    cap = max(1, (vmem_budget - fixed_bytes) // max(per_map, 1))
    cap = min(cap, max(1, (2 * target_block_bytes) // max(bytes_in, 1)))
    if max_tb is not None:
        cap = min(cap, max_tb)
    cap = int(min(cap, B))

    divisors = [t for t in range(1, cap + 1) if B % t == 0]
    tb = max(divisors)
    if tb < cap and 2 * tb <= cap:                    # degenerate divisors -> ragged
        tb = cap
    grid_len = -(-B // tb)

    # Megacore (v7x): the "parallel" grid axis is sharded across 2 TensorCores.
    # Prefer an even grid with >= 4 steps, but never shrink TB below half.
    if grid_len != 1 and (grid_len % 2 != 0 or grid_len < 4):
        for t in range(tb, (tb + 1) // 2 - 1, -1):
            g = -(-B // t)
            if g % 2 == 0 and g >= 4 and (B % t == 0 or B % tb != 0):
                tb, grid_len = t, g
                break
    return int(tb), int(grid_len)


# ---------------------------------------------------------------------------
# Pallas kernel: for every map t in the tile, out[t] = A @ x[t] @ B^T
# ---------------------------------------------------------------------------
def _make_bev_kernel(tb, rows_first, compute_dtype, unroll):
    def kernel(a_ref, bt_ref, x_ref, o_ref):
        # a_ref : (H_out, H_in)        row-interp weights (VMEM resident)
        # bt_ref: (W_in, W_lane)       col-interp weights, transposed
        # x_ref : (TB, H_in, W_in)     input maps for this grid step
        # o_ref : (TB, H_out, W_lane)  output block (stored per map, lane-dense)
        a = a_ref[...]
        bt = bt_ref[...]

        def body(t, carry):
            xt = x_ref[t].astype(compute_dtype)
            if rows_first:
                z = jnp.dot(a, xt, preferred_element_type=jnp.float32)
                y = jnp.dot(z.astype(compute_dtype), bt,
                            preferred_element_type=jnp.float32)
            else:
                z = jnp.dot(xt, bt, preferred_element_type=jnp.float32)
                y = jnp.dot(a, z.astype(compute_dtype),
                            preferred_element_type=jnp.float32)
            o_ref[t] = y.astype(o_ref.dtype)
            return carry

        lax.fori_loop(0, tb, body, 0, unroll=unroll)

    return kernel


def bev_grid_transform(x, input_scope, output_scope, prescale_factor=1.0,
                       *, compute_in_bf16=False, max_tb=None,
                       target_block_bytes=2 << 20):
    """JAX/Pallas equivalent of BEVGridTransform.forward. x: (N, C, H, W)."""
    N, C, H, W = x.shape

    # torch convention: grid[...,1]=y (output rows <- scope[0], samples height),
    #                   grid[...,0]=x (output cols <- scope[1], samples width)
    cy = _normalized_coords(input_scope[0], output_scope[0])
    cx = _normalized_coords(input_scope[1], output_scope[1])
    H_out, W_out = len(cy), len(cx)

    if prescale_factor != 1.0:
        ry = _resize_matrix(H, prescale_factor)               # (H_mid, H)
        rx = _resize_matrix(W, prescale_factor)               # (W_mid, W)
        row_mat = _grid_sample_matrix(cy, ry.shape[0]) @ ry   # (H_out, H)
        col_mat = _grid_sample_matrix(cx, rx.shape[0]) @ rx   # (W_out, W)
    else:
        row_mat = _grid_sample_matrix(cy, H)                  # (H_out, H)
        col_mat = _grid_sample_matrix(cx, W)                  # (W_out, W)

    # Output lane policy (no H padding / no H slice ever):
    #  - W_out >= 128: store the true width directly; only the tail lane tile is
    #    masked, and there is NO wrapper slice (no extra HBM pass on the output).
    #  - W_out < 128: pad to one full lane tile with zero weight columns so
    #    stores stay lane-dense; the (tiny) pad is sliced off in the wrapper.
    W_lane = W_out if W_out >= 128 else 128

    A_np = np.ascontiguousarray(row_mat)                      # (H_out, H)
    Bt_np = np.zeros((W, W_lane), np.float32)                 # (W, W_lane)
    Bt_np[:, :W_out] = col_mat.T

    out_dtype = x.dtype
    # bf16 inputs keep the fast MXU path; the optional flag lets f32 inputs run
    # the MXU in bf16 (f32 accumulation, f32 output) for compute-bound v5e.
    compute_dtype = (jnp.bfloat16
                     if (compute_in_bf16 and x.dtype == jnp.float32)
                     else x.dtype)
    A = jnp.asarray(A_np, dtype=compute_dtype)
    Bt = jnp.asarray(Bt_np, dtype=compute_dtype)

    B = N * C
    xb = x.reshape(B, H, W)

    in_itemsize = np.dtype(x.dtype).itemsize
    out_itemsize = np.dtype(out_dtype).itemsize
    w_itemsize = np.dtype(compute_dtype).itemsize
    bytes_in = H * W * in_itemsize
    bytes_out = H_out * W_lane * out_itemsize
    weight_bytes = (A_np.size + Bt_np.size) * w_itemsize
    # per-step f32 temporaries (intermediate + result) + general headroom
    temp_bytes = 2 * 4 * (H_out * W_lane + max(H_out * W, H * W_lane)) + (2 << 20)
    fixed_bytes = 2 * weight_bytes + temp_bytes

    physical = _physical_vmem_bytes()
    vmem_budget = _vmem_budget_bytes(physical)
    tb, grid_len = _plan_batch_tile(B, bytes_in, bytes_out, fixed_bytes,
                                    vmem_budget,
                                    target_block_bytes=target_block_bytes,
                                    max_tb=max_tb)
    est_usage = fixed_bytes + 2 * tb * (bytes_in + bytes_out)
    vmem_limit = int(min(max(vmem_budget, est_usage + (1 << 20)),
                         int(0.9 * physical)))

    # Static stage-order choice: run the shrinking direction first (fewer FLOPs,
    # smaller f32 intermediate).
    rows_first_flops = 2 * H_out * W * (H + W_lane)
    cols_first_flops = 2 * H * W_lane * (W + H_out)
    rows_first = rows_first_flops <= cols_first_flops

    flops = int(B * min(rows_first_flops, cols_first_flops))
    bytes_accessed = int(B * (bytes_in + bytes_out) + 2 * weight_bytes)

    unroll = int(min(tb, 8))
    kernel = _make_bev_kernel(tb, rows_first, compute_dtype, unroll)

    out = pl.pallas_call(
        kernel,
        out_shape=jax.ShapeDtypeStruct((B, H_out, W_lane), out_dtype),
        grid_spec=pltpu.PrefetchScalarGridSpec(
            num_scalar_prefetch=0,
            grid=(grid_len,),
            in_specs=[
                pl.BlockSpec((H_out, H), lambda b: (0, 0)),     # A stays resident
                pl.BlockSpec((W, W_lane), lambda b: (0, 0)),    # Bt stays resident
                pl.BlockSpec((tb, H, W), lambda b: (b, 0, 0)),
            ],
            out_specs=pl.BlockSpec((tb, H_out, W_lane), lambda b: (b, 0, 0)),
        ),
        compiler_params=pltpu.CompilerParams(
            dimension_semantics=("parallel",),
            vmem_limit_bytes=vmem_limit),
        cost_estimate=pl.CostEstimate(flops=flops, transcendentals=0,
                                      bytes_accessed=bytes_accessed),
    )(A, Bt, xb)

    if W_lane != W_out:
        # Only hit when W_out < 128 (tiny outputs); larger widths are stored at
        # their true size in-kernel, so no post-kernel copy is needed.
        out = out[:, :, :W_out]
    return out.reshape(N, C, H_out, W_out)


# ---------------------------------------------------------------------------
# independent numpy references (gather-based)
# ---------------------------------------------------------------------------
def _grid_sample_ref(x, cy, cx):
    """Direct bilinear grid_sample (align_corners=False, zero padding)."""
    N, C, H, W = x.shape
    iy = ((cy + 1.0) * H - 1.0) / 2.0
    ix = ((cx + 1.0) * W - 1.0) / 2.0
    y0 = np.floor(iy).astype(np.int64)
    x0 = np.floor(ix).astype(np.int64)
    wy1, wx1 = iy - y0, ix - x0
    wy0, wx0 = 1.0 - wy1, 1.0 - wx1
    out = np.zeros((N, C, len(cy), len(cx)), dtype=np.float64)
    for dy, wy in ((0, wy0), (1, wy1)):
        yy = y0 + dy
        my = (yy >= 0) & (yy < H)
        yc = np.clip(yy, 0, H - 1)
        for dx, wx in ((0, wx0), (1, wx1)):
            xx = x0 + dx
            mx = (xx >= 0) & (xx < W)
            xc = np.clip(xx, 0, W - 1)
            vals = x[:, :, yc[:, None], xc[None, :]]
            out += vals * ((wy * my)[:, None] * (wx * mx)[None, :])
    return out


def _resize_ref(x, scale):
    """Direct bilinear F.interpolate (align_corners=False, edge clamp)."""
    N, C, H, W = x.shape
    Ho, Wo = int(math.floor(H * scale)), int(math.floor(W * scale))

    def src_idx(out_sz, in_sz):
        src = np.maximum((np.arange(out_sz) + 0.5) / scale - 0.5, 0.0)
        i0 = np.minimum(np.floor(src).astype(np.int64), in_sz - 1)
        i1 = np.minimum(i0 + 1, in_sz - 1)
        w1 = src - i0
        return i0, i1, 1.0 - w1, w1

    y0, y1, wy0, wy1 = src_idx(Ho, H)
    x0, x1, wx0, wx1 = src_idx(Wo, W)
    out = (x[:, :, y0[:, None], x0[None, :]] * (wy0[:, None] * wx0[None, :]) +
           x[:, :, y0[:, None], x1[None, :]] * (wy0[:, None] * wx1[None, :]) +
           x[:, :, y1[:, None], x0[None, :]] * (wy1[:, None] * wx0[None, :]) +
           x[:, :, y1[:, None], x1[None, :]] * (wy1[:, None] * wx1[None, :]))
    return out


if __name__ == "__main__":
    key = jax.random.PRNGKey(0)
    x = jax.random.normal(key, (2, 4, 16, 16), dtype=jnp.float32)
    x64 = np.asarray(x, dtype=np.float64)

    # input BEV covers [-8, 8]; base output grid: 16 cells of 0.5m over [-4, 4]
    input_scope = [(-8.0, 8.0, 1.0), (-8.0, 8.0, 1.0)]
    output_scope = [(-4.0, 4.0, 0.5), (-4.0, 4.0, 0.5)]
    cy = _normalized_coords(input_scope[0], output_scope[0])
    cx = _normalized_coords(input_scope[1], output_scope[1])

    # --- 1. prescale == 1 (rows-first, lane-padded narrow output) ---
    out = jax.block_until_ready(
        bev_grid_transform(x, input_scope, output_scope, prescale_factor=1.0))
    ref = _grid_sample_ref(x64, cy, cx)
    assert out.shape == (2, 4, len(cy), len(cx))
    assert np.allclose(np.asarray(out), ref, atol=1e-4), "mismatch (prescale=1)"

    # --- 2. prescale == 2 (exercises the F.interpolate path) ---
    out2 = jax.block_until_ready(
        bev_grid_transform(x, input_scope, output_scope, prescale_factor=2.0))
    ref2 = _grid_sample_ref(_resize_ref(x64, 2.0), cy, cx)
    assert np.allclose(np.asarray(out2), ref2, atol=1e-4), "mismatch (prescale=2)"

    # --- 3. bf16 input: bf16 weights / fast MXU path, f32 accumulation ---
    # (the intermediate between the two matmuls is rounded to bf16, hence the
    #  loose tolerance; PyTorch in bf16 rounds similarly.)
    out_bf = jax.block_until_ready(
        bev_grid_transform(x.astype(jnp.bfloat16), input_scope, output_scope))
    assert out_bf.dtype == jnp.bfloat16
    assert np.allclose(np.asarray(out_bf, dtype=np.float64), ref, atol=1e-1), \
        "mismatch (bf16)"

    # --- 4. tall aligned output (256 x 128): cols-first order, no wrapper slice ---
    out_scope_tall = [(-4.0, 4.0, 0.03125), (-4.0, 4.0, 0.0625)]
    cy_t = _normalized_coords(input_scope[0], out_scope_tall[0])
    cx_t = _normalized_coords(input_scope[1], out_scope_tall[1])
    out_t = jax.block_until_ready(
        bev_grid_transform(x, input_scope, out_scope_tall))
    ref_t = _grid_sample_ref(x64, cy_t, cx_t)
    assert out_t.shape == (2, 4, 256, 128)
    assert np.allclose(np.asarray(out_t), ref_t, atol=1e-4), "mismatch (tall)"

    # --- 5. ragged batch (B=7, forced small tile) + misaligned wide output ---
    key2 = jax.random.PRNGKey(1)
    x7 = jax.random.normal(key2, (1, 7, 16, 16), dtype=jnp.float32)
    out_scope_wide = [(-4.0, 4.0, 0.5), (-4.25, 4.25, 0.0625)]
    cy_w = _normalized_coords(input_scope[0], out_scope_wide[0])
    cx_w = _normalized_coords(input_scope[1], out_scope_wide[1])
    out_r = jax.block_until_ready(
        bev_grid_transform(x7, input_scope, out_scope_wide, max_tb=4))
    ref_r = _grid_sample_ref(np.asarray(x7, dtype=np.float64), cy_w, cx_w)
    assert out_r.shape == (1, 7, 16, 136)
    assert np.allclose(np.asarray(out_r), ref_r, atol=1e-4), "mismatch (ragged)"

    # --- 6. f32 input with bf16 compute (v5e-style flag), f32 output ---
    out_c = jax.block_until_ready(
        bev_grid_transform(x, input_scope, output_scope, compute_in_bf16=True))
    assert out_c.dtype == jnp.float32
    assert np.allclose(np.asarray(out_c), ref, atol=1e-1), "mismatch (bf16 compute)"

    print("KERNEL_OK")
</pallas_src>

<mosaic_0001>
module attributes {stable_mosaic.version = 11 : i64} {
  func.func @kernel(%arg0: i32, %arg1: memref<16x16xf32, #tpu.memory_space<vmem>>, %arg2: memref<16x128xf32, #tpu.memory_space<vmem>>, %arg3: memref<8x16x16xf32, #tpu.memory_space<vmem>>, %arg4: memref<8x16x128xf32, #tpu.memory_space<vmem>>) attributes {dimension_semantics = [#tpu.dimension_semantics<parallel>], iteration_bounds = array<i64: 1>, scalar_prefetch = 0 : i64, scratch_operands = 0 : i64, tpu.core_type = #tpu.core_type<tc>, window_params = [{pipeline_mode = #tpu.pipeline_mode<synchronous>, transform_indices = @transform_0, window_bounds = array<i64: 16, 16>}, {pipeline_mode = #tpu.pipeline_mode<synchronous>, transform_indices = @transform_1, window_bounds = array<i64: 16, 128>}, {transform_indices = @transform_2, window_bounds = array<i64: 8, 16, 16>}, {transform_indices = @transform_3, window_bounds = array<i64: 8, 16, 128>}]} {
    %c0 = arith.constant 0 : index
    %c0_0 = arith.constant 0 : index
    %0 = vector.load %arg1[%c0, %c0_0] : memref<16x16xf32, #tpu.memory_space<vmem>>, vector<16x16xf32>
    %c0_1 = arith.constant 0 : index
    %c0_2 = arith.constant 0 : index
    %1 = vector.load %arg2[%c0_1, %c0_2] : memref<16x128xf32, #tpu.memory_space<vmem>>, vector<16x128xf32>
    %c0_i32 = arith.constant 0 : i32
    %2 = arith.index_cast %c0_i32 : i32 to index
    %c0_3 = arith.constant 0 : index
    %c0_4 = arith.constant 0 : index
    %3 = vector.load %arg3[%2, %c0_3, %c0_4] : memref<8x16x16xf32, #tpu.memory_space<vmem>>, vector<1x16x16xf32>
    %4 = vector.shape_cast %3 : vector<1x16x16xf32> to vector<16x16xf32>
    %cst = arith.constant dense<0.000000e+00> : vector<16x16xf32>
    %5 = tpu.matmul %0, %4, %cst {dimension_numbers = #tpu.dot_dimension_numbers<[1], [0], [0], [1], [0, 0, 1, 1], [], []>} : vector<16x16xf32>, vector<16x16xf32>, vector<16x16xf32> -> vector<16x16xf32>
    %cst_5 = arith.constant dense<0.000000e+00> : vector<16x128xf32>
    %6 = tpu.matmul %5, %1, %cst_5 {dimension_numbers = #tpu.dot_dimension_numbers<[1], [0], [0], [1], [0, 0, 1, 1], [], []>} : vector<16x16xf32>, vector<16x128xf32>, vector<16x128xf32> -> vector<16x128xf32>
    %7 = arith.index_cast %c0_i32 : i32 to index
    %c0_6 = arith.constant 0 : index
    %c0_7 = arith.constant 0 : index
    %8 = vector.load %arg4[%7, %c0_6, %c0_7] : memref<8x16x128xf32, #tpu.memory_space<vmem>>, vector<1x16x128xf32>
    %9 = vector.shape_cast %8 : vector<1x16x128xf32> to vector<16x128xf32>
    %10 = vector.shape_cast %6 : vector<16x128xf32> to vector<1x16x128xf32>
    tpu.vector_store %arg4[%7, %c0_6, %c0_7], %10 {strides = array<i32>} : memref<8x16x128xf32, #tpu.memory_space<vmem>>, vector<1x16x128xf32>,
    %c1_i32 = arith.constant 1 : i32
    %11 = arith.index_cast %c1_i32 : i32 to index
    %c0_8 = arith.constant 0 : index
    %c0_9 = arith.constant 0 : index
    %12 = vector.load %arg3[%11, %c0_8, %c0_9] : memref<8x16x16xf32, #tpu.memory_space<vmem>>, vector<1x16x16xf32>
    %13 = vector.shape_cast %12 : vector<1x16x16xf32> to vector<16x16xf32>
    %cst_10 = arith.constant dense<0.000000e+00> : vector<16x16xf32>
    %14 = tpu.matmul %0, %13, %cst_10 {dimension_numbers = #tpu.dot_dimension_numbers<[1], [0], [0], [1], [0, 0, 1, 1], [], []>} : vector<16x16xf32>, vector<16x16xf32>, vector<16x16xf32> -> vector<16x16xf32>
    %cst_11 = arith.constant dense<0.000000e+00> : vector<16x128xf32>
    %15 = tpu.matmul %14, %1, %cst_11 {dimension_numbers = #tpu.dot_dimension_numbers<[1], [0], [0], [1], [0, 0, 1, 1], [], []>} : vector<16x16xf32>, vector<16x128xf32>, vector<16x128xf32> -> vector<16x128xf32>
    %16 = arith.index_cast %c1_i32 : i32 to index
    %c0_12 = arith.constant 0 : index
    %c0_13 = arith.constant 0 : index
    %17 = vector.load %arg4[%16, %c0_12, %c0_13] : memref<8x16x128xf32, #tpu.memory_space<vmem>>, vector<1x16x128xf32>
    %18 = vector.shape_cast %17 : vector<1x16x128xf32> to vector<16x128xf32>
    %19 = vector.shape_cast %15 : vector<16x128xf32> to vector<1x16x128xf32>
    tpu.vector_store %arg4[%16, %c0_12, %c0_13], %19 {strides = array<i32>} : memref<8x16x128xf32, #tpu.memory_space<vmem>>, vector<1x16x128xf32>,
    %c2_i32 = arith.constant 2 : i32
    %20 = arith.index_cast %c2_i32 : i32 to index
    %c0_14 = arith.constant 0 : index
    %c0_15 = arith.constant 0 : index
    %21 = vector.load %arg3[%20, %c0_14, %c0_15] : memref<8x16x16xf32, #tpu.memory_space<vmem>>, vector<1x16x16xf32>
    %22 = vector.shape_cast %21 : vector<1x16x16xf32> to vector<16x16xf32>
    %cst_16 = arith.constant dense<0.000000e+00> : vector<16x16xf32>
    %23 = tpu.matmul %0, %22, %cst_16 {dimension_numbers = #tpu.dot_dimension_numbers<[1], [0], [0], [1], [0, 0, 1, 1], [], []>} : vector<16x16xf32>, vector<16x16xf32>, vector<16x16xf32> -> vector<16x16xf32>
    %cst_17 = arith.constant dense<0.000000e+00> : vector<16x128xf32>
    %24 = tpu.matmul %23, %1, %cst_17 {dimension_numbers = #tpu.dot_dimension_numbers<[1], [0], [0], [1], [0, 0, 1, 1], [], []>} : vector<16x16xf32>, vector<16x128xf32>, vector<16x128xf32> -> vector<16x128xf32>
    %25 = arith.index_cast %c2_i32 : i32 to index
    %c0_18 = arith.constant 0 : index
    %c0_19 = arith.constant 0 : index
    %26 = vector.load %arg4[%25, %c0_18, %c0_19] : memref<8x16x128xf32, #tpu.memory_space<vmem>>, vector<1x16x128xf32>
    %27 = vector.shape_cast %26 : vector<1x16x128xf32> to vector<16x128xf32>
    %28 = vector.shape_cast %24 : vector<16x128xf32> to vector<1x16x128xf32>
    tpu.vector_store %arg4[%25, %c0_18, %c0_19], %28 {strides = array<i32>} : memref<8x16x128xf32, #tpu.memory_space<vmem>>, vector<1x16x128xf32>,
    %c3_i32 = arith.constant 3 : i32
    %29 = arith.index_cast %c3_i32 : i32 to index
    %c0_20 = arith.constant 0 : index
    %c0_21 = arith.constant 0 : index
    %30 = vector.load %arg3[%29, %c0_20, %c0_21] : memref<8x16x16xf32, #tpu.memory_space<vmem>>, vector<1x16x16xf32>
    %31 = vector.shape_cast %30 : vector<1x16x16xf32> to vector<16x16xf32>
    %cst_22 = arith.constant dense<0.000000e+00> : vector<16x16xf32>
    %32 = tpu.matmul %0, %31, %cst_22 {dimension_numbers = #tpu.dot_dimension_numbers<[1], [0], [0], [1], [0, 0, 1, 1], [], []>} : vector<16x16xf32>, vector<16x16xf32>, vector<16x16xf32> -> vector<16x16xf32>
    %cst_23 = arith.constant dense<0.000000e+00> : vector<16x128xf32>
    %33 = tpu.matmul %32, %1, %cst_23 {dimension_numbers = #tpu.dot_dimension_numbers<[1], [0], [0], [1], [0, 0, 1, 1], [], []>} : vector<16x16xf32>, vector<16x128xf32>, vector<16x128xf32> -> vector<16x128xf32>
    %34 = arith.index_cast %c3_i32 : i32 to index
    %c0_24 = arith.constant 0 : index
    %c0_25 = arith.constant 0 : index
    %35 = vector.load %arg4[%34, %c0_24, %c0_25] : memref<8x16x128xf32, #tpu.memory_space<vmem>>, vector<1x16x128xf32>
    %36 = vector.shape_cast %35 : vector<1x16x128xf32> to vector<16x128xf32>
    %37 = vector.shape_cast %33 : vector<16x128xf32> to vector<1x16x128xf32>
    tpu.vector_store %arg4[%34, %c0_24, %c0_25], %37 {strides = array<i32>} : memref<8x16x128xf32, #tpu.memory_space<vmem>>, vector<1x16x128xf32>,
    %c4_i32 = arith.constant 4 : i32
    %38 = arith.index_cast %c4_i32 : i32 to index
    %c0_26 = arith.constant 0 : index
    %c0_27 = arith.constant 0 : index
    %39 = vector.load %arg3[%38, %c0_26, %c0_27] : memref<8x16x16xf32, #tpu.memory_space<vmem>>, vector<1x16x16xf32>
    %40 = vector.shape_cast %39 : vector<1x16x16xf32> to vector<16x16xf32>
    %cst_28 = arith.constant dense<0.000000e+00> : vector<16x16xf32>
    %41 = tpu.matmul %0, %40, %cst_28 {dimension_numbers = #tpu.dot_dimension_numbers<[1], [0], [0], [1], [0, 0, 1, 1], [], []>} : vector<16x16xf32>, vector<16x16xf32>, vector<16x16xf32> -> vector<16x16xf32>
    %cst_29 = arith.constant dense<0.000000e+00> : vector<16x128xf32>
    %42 = tpu.matmul %41, %1, %cst_29 {dimension_numbers = #tpu.dot_dimension_numbers<[1], [0], [0], [1], [0, 0, 1, 1], [], []>} : vector<16x16xf32>, vector<16x128xf32>, vector<16x128xf32> -> vector<16x128xf32>
    %43 = arith.index_cast %c4_i32 : i32 to index
    %c0_30 = arith.constant 0 : index
    %c0_31 = arith.constant 0 : index
    %44 = vector.load %arg4[%43, %c0_30, %c0_31] : memref<8x16x128xf32, #tpu.memory_space<vmem>>, vector<1x16x128xf32>
    %45 = vector.shape_cast %44 : vector<1x16x128xf32> to vector<16x128xf32>
    %46 = vector.shape_cast %42 : vector<16x128xf32> to vector<1x16x128xf32>
    tpu.vector_store %arg4[%43, %c0_30, %c0_31], %46 {strides = array<i32>} : memref<8x16x128xf32, #tpu.memory_space<vmem>>, vector<1x16x128xf32>,
    %c5_i32 = arith.constant 5 : i32
    %47 = arith.index_cast %c5_i32 : i32 to index
    %c0_32 = arith.constant 0 : index
    %c0_33 = arith.constant 0 : index
    %48 = vector.load %arg3[%47, %c0_32, %c0_33] : memref<8x16x16xf32, #tpu.memory_space<vmem>>, vector<1x16x16xf32>
    %49 = vector.shape_cast %48 : vector<1x16x16xf32> to vector<16x16xf32>
    %cst_34 = arith.constant dense<0.000000e+00> : vector<16x16xf32>
    %50 = tpu.matmul %0, %49, %cst_34 {dimension_numbers = #tpu.dot_dimension_numbers<[1], [0], [0], [1], [0, 0, 1, 1], [], []>} : vector<16x16xf32>, vector<16x16xf32>, vector<16x16xf32> -> vector<16x16xf32>
    %cst_35 = arith.constant dense<0.000000e+00> : vector<16x128xf32>
    %51 = tpu.matmul %50, %1, %cst_35 {dimension_numbers = #tpu.dot_dimension_numbers<[1], [0], [0], [1], [0, 0, 1, 1], [], []>} : vector<16x16xf32>, vector<16x128xf32>, vector<16x128xf32> -> vector<16x128xf32>
    %52 = arith.index_cast %c5_i32 : i32 to index
    %c0_36 = arith.constant 0 : index
    %c0_37 = arith.constant 0 : index
    %53 = vector.load %arg4[%52, %c0_36, %c0_37] : memref<8x16x128xf32, #tpu.memory_space<vmem>>, vector<1x16x128xf32>
    %54 = vector.shape_cast %53 : vector<1x16x128xf32> to vector<16x128xf32>
    %55 = vector.shape_cast %51 : vector<16x128xf32> to vector<1x16x128xf32>
    tpu.vector_store %arg4[%52, %c0_36, %c0_37], %55 {strides = array<i32>} : memref<8x16x128xf32, #tpu.memory_space<vmem>>, vector<1x16x128xf32>,
    %c6_i32 = arith.constant 6 : i32
    %56 = arith.index_cast %c6_i32 : i32 to index
    %c0_38 = arith.constant 0 : index
    %c0_39 = arith.constant 0 : index
    %57 = vector.load %arg3[%56, %c0_38, %c0_39] : memref<8x16x16xf32, #tpu.memory_space<vmem>>, vector<1x16x16xf32>
    %58 = vector.shape_cast %57 : vector<1x16x16xf32> to vector<16x16xf32>
    %cst_40 = arith.constant dense<0.000000e+00> : vector<16x16xf32>
    %59 = tpu.matmul %0, %58, %cst_40 {dimension_numbers = #tpu.dot_dimension_numbers<[1], [0], [0], [1], [0, 0, 1, 1], [], []>} : vector<16x16xf32>, vector<16x16xf32>, vector<16x16xf32> -> vector<16x16xf32>
    %cst_41 = arith.constant dense<0.000000e+00> : vector<16x128xf32>
    %60 = tpu.matmul %59, %1, %cst_41 {dimension_numbers = #tpu.dot_dimension_numbers<[1], [0], [0], [1], [0, 0, 1, 1], [], []>} : vector<16x16xf32>, vector<16x128xf32>, vector<16x128xf32> -> vector<16x128xf32>
    %61 = arith.index_cast %c6_i32 : i32 to index
    %c0_42 = arith.constant 0 : index
    %c0_43 = arith.constant 0 : index
    %62 = vector.load %arg4[%61, %c0_42, %c0_43] : memref<8x16x128xf32, #tpu.memory_space<vmem>>, vector<1x16x128xf32>
    %63 = vector.shape_cast %62 : vector<1x16x128xf32> to vector<16x128xf32>
    %64 = vector.shape_cast %60 : vector<16x128xf32> to vector<1x16x128xf32>
    tpu.vector_store %arg4[%61, %c0_42, %c0_43], %64 {strides = array<i32>} : memref<8x16x128xf32, #tpu.memory_space<vmem>>, vector<1x16x128xf32>,
    %c7_i32 = arith.constant 7 : i32
    %65 = arith.index_cast %c7_i32 : i32 to index
    %c0_44 = arith.constant 0 : index
    %c0_45 = arith.constant 0 : index
    %66 = vector.load %arg3[%65, %c0_44, %c0_45] : memref<8x16x16xf32, #tpu.memory_space<vmem>>, vector<1x16x16xf32>
    %67 = vector.shape_cast %66 : vector<1x16x16xf32> to vector<16x16xf32>
    %cst_46 = arith.constant dense<0.000000e+00> : vector<16x16xf32>
    %68 = tpu.matmul %0, %67, %cst_46 {dimension_numbers = #tpu.dot_dimension_numbers<[1], [0], [0], [1], [0, 0, 1, 1], [], []>} : vector<16x16xf32>, vector<16x16xf32>, vector<16x16xf32> -> vector<16x16xf32>
    %cst_47 = arith.constant dense<0.000000e+00> : vector<16x128xf32>
    %69 = tpu.matmul %68, %1, %cst_47 {dimension_numbers = #tpu.dot_dimension_numbers<[1], [0], [0], [1], [0, 0, 1, 1], [], []>} : vector<16x16xf32>, vector<16x128xf32>, vector<16x128xf32> -> vector<16x128xf32>
    %70 = arith.index_cast %c7_i32 : i32 to index
    %c0_48 = arith.constant 0 : index
    %c0_49 = arith.constant 0 : index
    %71 = vector.load %arg4[%70, %c0_48, %c0_49] : memref<8x16x128xf32, #tpu.memory_space<vmem>>, vector<1x16x128xf32>
    %72 = vector.shape_cast %71 : vector<1x16x128xf32> to vector<16x128xf32>
    %73 = vector.shape_cast %69 : vector<16x128xf32> to vector<1x16x128xf32>
    tpu.vector_store %arg4[%70, %c0_48, %c0_49], %73 {strides = array<i32>} : memref<8x16x128xf32, #tpu.memory_space<vmem>>, vector<1x16x128xf32>,
    %c8_i32 = arith.constant 8 : i32
    return
  }
  func.func @transform_0(%arg0: i32) -> (i32, i32) {
    %c0_i32 = arith.constant 0 : i32
    %c0_i32_0 = arith.constant 0 : i32
    %c0_i32_1 = arith.constant 0 : i32
    return %c0_i32, %c0_i32_0 : i32, i32
  }
  func.func @transform_1(%arg0: i32) -> (i32, i32) {
    %c0_i32 = arith.constant 0 : i32
    %c0_i32_0 = arith.constant 0 : i32
    %c0_i32_1 = arith.constant 0 : i32
    return %c0_i32, %c0_i32_0 : i32, i32
  }
  func.func @transform_2(%arg0: i32) -> (i32, i32, i32) {
    %c0_i32 = arith.constant 0 : i32
    %c0_i32_0 = arith.constant 0 : i32
    %c0_i32_1 = arith.constant 0 : i32
    return %arg0, %c0_i32, %c0_i32_0 : i32, i32, i32
  }
  func.func @transform_3(%arg0: i32) -> (i32, i32, i32) {
    %c0_i32 = arith.constant 0 : i32
    %c0_i32_0 = arith.constant 0 : i32
    %c0_i32_1 = arith.constant 0 : i32
    return %arg0, %c0_i32, %c0_i32_0 : i32, i32, i32
  }
}

</mosaic_0001>

<llo_original>
// kernel: tpu_custom_call.1
$region0: #{tpu_custom_call.1}
  #allocation0 [shape = 'u32[]', space=smem, size = 0x4, offset = 0x4, fixed_abs, tag = 'smem constant byte address 0x4 - core index']
  #allocation1 [shape = 'u32[144,128]{1,0:T(1,128)}', space=vmem, size = 0x12000, scoped, tag = 'internal scratch']
  %s0 = inlined_call_operand.hbm [shape: f32[16,16], index: 0, kind: input, shape index: {}]
  %s1 = inlined_call_operand.hbm [shape: f32[16,128], index: 1, kind: input, shape index: {}]
  %s2 = inlined_call_operand.hbm [shape: f32[8,16,16], index: 2, kind: input, shape index: {}]
  %s3 = inlined_call_operand.hbm [shape: f32[8,16,128], index: 3, kind: output, shape index: {}]
  %s4 = sld [smem:[#allocation0]]
  $region34: #{tpu_custom_call.1} parent=0
    _
  %s6 = ssub.s32 1, %s4
  %s7 = scalar_select 0, %s6, %s4
  $region1: #{tpu_custom_call.1} parent=0
    #allocation2 [shape = 'u8[8192]{0}', space=vmem, size = 0x2000, scoped, tag = 'input window, operand 0, single buffered']
    #allocation3 [shape = 's32[1]{0}', space=sflag, size = 0x4, scoped, tag = 'scoped memory for tpu_custom_call.1']
    #allocation4 [shape = 's32[1]{0}', space=sflag, size = 0x4, scoped, tag = 'scoped memory for tpu_custom_call.1']
    #allocation5 [shape = 'u8[8192]{0}', space=vmem, size = 0x2000, scoped, tag = 'input window, operand 1, single buffered']
    #allocation6 [shape = 's32[1]{0}', space=sflag, size = 0x4, scoped, tag = 'scoped memory for tpu_custom_call.1']
    #allocation7 [shape = 'u8[65536]{0}', space=vmem, size = 0x10000, scoped, tag = 'input window, operand 2, single buffered']
    #allocation8 [shape = 'u8[65536]{0}', space=vmem, size = 0x10000, scoped, tag = 'output window, operand 0, single buffered']
    %8 = vsyncpa [#allocation3], 0
    %9 = vsyncpa [#allocation6], 0
    %10 = vsyncpa [#allocation4], 0
    // Predicated region
    $region2: #{tpu_custom_call.1} parent=1 // pred_check
      _
    $region3: #{tpu_custom_call.1} parent=1 // pred_check_branch
      %12 = sbr.rel (0) target = $region5
    $region4: #{tpu_custom_call.1} parent=1 // pred_region
      %s14 = ssub.s32 256, 256
      %15 = vsyncadd [#allocation3], %s14
      %s16 = sshll.u32 [#allocation2], 4
      %s17 = int_to_ptr.vmem [resolvable:$true] %s16
      %22 = dma.hbm_to_vmem [thread:$0]  %s0, 256, %s17, [#allocation3], 128, 128, 8
    $region5: #{tpu_custom_call.1} parent=1 // pred_fallthru
      _
    // Predicated region
    $region6: #{tpu_custom_call.1} parent=1 // pred_check
      _
    $region7: #{tpu_custom_call.1} parent=1 // pred_check_branch
      %24 = sbr.rel (0) target = $region9
    $region8: #{tpu_custom_call.1} parent=1 // pred_region
      %s26 = ssub.s32 256, 256
      %27 = vsyncadd [#allocation6], %s26
      %s28 = sshll.u32 [#allocation5], 4
      %s29 = int_to_ptr.vmem [resolvable:$true] %s28
      %34 = dma.hbm_to_vmem [thread:$0]  %s1, 256, %s29, [#allocation6], 128, 128, 8
    $region9: #{tpu_custom_call.1} parent=1 // pred_fallthru
      _
    // Predicated region
    $region10: #{tpu_custom_call.1} parent=1 // pred_check
      _
    $region11: #{tpu_custom_call.1} parent=1 // pred_check_branch
      %36 = sbr.rel (0) target = $region13
    $region12: #{tpu_custom_call.1} parent=1 // pred_region
      %s38 = ssub.s32 2048, 2048
      %39 = vsyncadd [#allocation6], %s38
      %s40 = sshll.u32 [#allocation7], 4
      %s41 = int_to_ptr.vmem [resolvable:$true] %s40
      %46 = dma.hbm_to_vmem [thread:$0]  %s2, 2048, %s41, [#allocation6], 128, 128, 8
    $region13: #{tpu_custom_call.1} parent=1 // pred_fallthru
      _
    // Predicated region
    $region14: #{tpu_custom_call.1} parent=1 // pred_check
      _
    $region15: #{tpu_custom_call.1} parent=1 // pred_check_branch
      %48 = sbr.rel (0) target = $region17
    $region16: #{tpu_custom_call.1} parent=1 // pred_region
      %49 = dma.done [#allocation3], 256
    $region17: #{tpu_custom_call.1} parent=1 // pred_fallthru
      _
    // Predicated region
    $region18: #{tpu_custom_call.1} parent=1 // pred_check
      _
    $region19: #{tpu_custom_call.1} parent=1 // pred_check_branch
      %51 = sbr.rel (0) target = $region21
    $region20: #{tpu_custom_call.1} parent=1 // pred_region
      %52 = dma.done [#allocation6], 256
    $region21: #{tpu_custom_call.1} parent=1 // pred_fallthru
      _
    // Predicated region
    $region22: #{tpu_custom_call.1} parent=1 // pred_check
      _
    $region23: #{tpu_custom_call.1} parent=1 // pred_check_branch
      %54 = sbr.rel (0) target = $region25
    $region24: #{tpu_custom_call.1} parent=1 // pred_region
      %55 = dma.done [#allocation6], 2048
    $region25: #{tpu_custom_call.1} parent=1 // pred_fallthru
      _
    %v56 = vld [vmem:[#allocation2] sm:$0xff]
    %v57 = vld [vmem:[#allocation2 + $0x8] sm:$0xff]
    %v58 = vld [vmem:[#allocation5] sm:$0xff]
    %v59 = vld [vmem:[#allocation5 + $0x8] sm:$0xff]
    %v60 = vld [vmem:[#allocation7] sm:$0xff]
    %v61 = vld [vmem:[#allocation7 + $0x8] sm:$0xff]
    %vm62 = vcmask 130048
    %v64 = vsel %vm62, %v56, 0
    %v67 = vsel %vm62, %v57, 0
    %69 = vmatprep.subr.mxu0 0.0
    %70 = vmatpush1.msra.mxu0 %v60
    %71 = vmatprep.subr.mxu0 0.0
    %72 = vmatpush1.msra.mxu0 %v61
    %73 = vmatprep.subr.mxu0 0.0
    %74 = vmatpush1.msra.mxu0 0.0
    %75 = vmatprep.subr.mxu0 0.0
    %76 = vmatpush1.msra.mxu0 0.0
    %77 = vmatprep.subr.mxu0 0.0
    %78 = vmatpush1.msra.mxu0 0.0
    %79 = vmatprep.subr.mxu0 0.0
    %80 = vmatpush1.msra.mxu0 0.0
    %81 = vmatprep.subr.mxu0 0.0
    %82 = vmatpush1.msra.mxu0 0.0
    %83 = vmatprep.subr.mxu0 0.0
    %84 = vmatpush1.msra.mxu0 0.0
    %85 = vmatprep.subr.mxu0 0.0
    %86 = vmatpush1.msra.mxu0 0.0
    %87 = vmatprep.subr.mxu0 0.0
    %88 = vmatpush1.msra.mxu0 0.0
    %89 = vmatprep.subr.mxu0 0.0
    %90 = vmatpush1.msra.mxu0 0.0
    %91 = vmatprep.subr.mxu0 0.0
    %92 = vmatpush1.msra.mxu0 0.0
    %93 = vmatprep.subr.mxu0 0.0
    %94 = vmatpush1.msra.mxu0 0.0
    %95 = vmatprep.subr.mxu0 0.0
    %96 = vmatpush1.msra.mxu0 0.0
    %97 = vmatprep.subr.mxu0 0.0
    %98 = vmatpush1.msra.mxu0 0.0
    %99 = vmatprep.subr.mxu0 0.0
    %100 = vmatpush1.msra.mxu0 0.0
    %101 = vmatprep.subr.mxu0 0.0
    %102 = vmatpush1.msra.mxu0 0.0
    %103 = vmatprep.subr.mxu0 0.0
    %104 = vmatpush1.msra.mxu0 0.0
    %105 = vmatprep.subr.mxu0 0.0
    %106 = vmatpush1.msra.mxu0 0.0
    %107 = vmatprep.subr.mxu0 0.0
    %108 = vmatpush1.msra.mxu0 0.0
    %109 = vmatprep.subr.mxu0 0.0
    %110 = vmatpush1.msra.mxu0 0.0
    %111 = vmatprep.subr.mxu0 0.0
    %112 = vmatpush1.msra.mxu0 0.0
    %113 = vmatprep.subr.mxu0 0.0
    %114 = vmatpush1.msra.mxu0 0.0
    %115 = vmatprep.subr.mxu0 0.0
    %116 = vmatpush1.msra.mxu0 0.0
    %117 = vmatprep.subr.mxu0 0.0
    %118 = vmatpush1.msra.mxu0 0.0
    %119 = vmatprep.subr.mxu0 0.0
    %120 = vmatpush1.msra.mxu0 0.0
    %121 = vmatprep.subr.mxu0 0.0
    %122 = vmatpush1.msra.mxu0 0.0
    %123 = vmatprep.subr.mxu0 0.0
    %124 = vmatpush1.msra.mxu0 0.0
    %125 = vmatprep.subr.mxu0 0.0
    %126 = vmatpush1.msra.mxu0 0.0
    %127 = vmatprep.subr.mxu0 0.0
    %128 = vmatpush1.msra.mxu0 0.0
    %129 = vmatprep.subr.mxu0 0.0
    %130 = vmatpush1.msra.mxu0 0.0
    %131 = vmatprep.subr.mxu0 0.0
    %132 = vmatpush1.msra.mxu0 0.0
    %133 = vmatprep.mubr.f32.mxu0 0.0
    %134 = vmatmul.mubr.f32.gmra.mrb[0].mxu0 %v64
    %v135 = vpop.f32.mrb[0].mxu0
    %v136 = vadd.f32 0.0, %v135
    %v137 = vpop.f32.mrb[0].mxu0
    %138 = vmatprep.mubr.f32.mxu0 0.0
    %139 = vmatmul.mubr.f32.gmra.mrb[0].mxu0 %v67
    %v140 = vpop.f32.mrb[0].mxu0
    %v141 = vadd.f32 0.0, %v140
    %v142 = vpop.f32.mrb[0].mxu0
    %143 = vdwg.mxu0
    %v145 = vsel %vm62, %v136, 0
    %v148 = vsel %vm62, %v141, 0
    %150 = vmatprep.subr.mxu0 0.0
    %151 = vmatpush1.msra.mxu0 %v58
    %152 = vmatprep.subr.mxu0 0.0
    %153 = vmatpush1.msra.mxu0 %v59
    %154 = vmatprep.subr.mxu0 0.0
    %155 = vmatpush1.msra.mxu0 0.0
    %156 = vmatprep.subr.mxu0 0.0
    %157 = vmatpush1.msra.mxu0 0.0
    %158 = vmatprep.subr.mxu0 0.0
    %159 = vmatpush1.msra.mxu0 0.0
    %160 = vmatprep.subr.mxu0 0.0
    %161 = vmatpush1.msra.mxu0 0.0
    %162 = vmatprep.subr.mxu0 0.0
    %163 = vmatpush1.msra.mxu0 0.0
    %164 = vmatprep.subr.mxu0 0.0
    %165 = vmatpush1.msra.mxu0 0.0
    %166 = vmatprep.subr.mxu0 0.0
    %167 = vmatpush1.msra.mxu0 0.0
    %168 = vmatprep.subr.mxu0 0.0
    %169 = vmatpush1.msra.mxu0 0.0
    %170 = vmatprep.subr.mxu0 0.0
    %171 = vmatpush1.msra.mxu0 0.0
    %172 = vmatprep.subr.mxu0 0.0
    %173 = vmatpush1.msra.mxu0 0.0
    %174 = vmatprep.subr.mxu0 0.0
    %175 = vmatpush1.msra.mxu0 0.0
    %176 = vmatprep.subr.mxu0 0.0
    %177 = vmatpush1.msra.mxu0 0.0
    %178 = vmatprep.subr.mxu0 0.0
    %179 = vmatpush1.msra.mxu0 0.0
    %180 = vmatprep.subr.mxu0 0.0
    %181 = vmatpush1.msra.mxu0 0.0
    %182 = vmatprep.subr.mxu0 0.0
    %183 = vmatpush1.msra.mxu0 0.0
    %184 = vmatprep.subr.mxu0 0.0
    %185 = vmatpush1.msra.mxu0 0.0
    %186 = vmatprep.subr.mxu0 0.0
    %187 = vmatpush1.msra.mxu0 0.0
    %188 = vmatprep.subr.mxu0 0.0
    %189 = vmatpush1.msra.mxu0 0.0
    %190 = vmatprep.subr.mxu0 0.0
    %191 = vmatpush1.msra.mxu0 0.0
    %192 = vmatprep.subr.mxu0 0.0
    %193 = vmatpush1.msra.mxu0 0.0
    %194 = vmatprep.subr.mxu0 0.0
    %195 = vmatpush1.msra.mxu0 0.0
    %196 = vmatprep.subr.mxu0 0.0
    %197 = vmatpush1.msra.mxu0 0.0
    %198 = vmatprep.subr.mxu0 0.0
    %199 = vmatpush1.msra.mxu0 0.0
    %200 = vmatprep.subr.mxu0 0.0
    %201 = vmatpush1.msra.mxu0 0.0
    %202 = vmatprep.subr.mxu0 0.0
    %203 = vmatpush1.msra.mxu0 0.0
    %204 = vmatprep.subr.mxu0 0.0
    %205 = vmatpush1.msra.mxu0 0.0
    %206 = vmatprep.subr.mxu0 0.0
    %207 = vmatpush1.msra.mxu0 0.0
    %208 = vmatprep.subr.mxu0 0.0
    %209 = vmatpush1.msra.mxu0 0.0
    %210 = vmatprep.subr.mxu0 0.0
    %211 = vmatpush1.msra.mxu0 0.0
    %212 = vmatprep.subr.mxu0 0.0
    %213 = vmatpush1.msra.mxu0 0.0
    %214 = vmatprep.mubr.f32.mxu0 0.0
    %215 = vmatmul.mubr.f32.gmra.mrb[0].mxu0 %v145
    %v216 = vpop.f32.mrb[0].mxu0
    %v217 = vadd.f32 0.0, %v216
    %v218 = vpop.f32.mrb[0].mxu0
    %219 = vmatprep.mubr.f32.mxu0 0.0
    %220 = vmatmul.mubr.f32.gmra.mrb[0].mxu0 %v148
    %v221 = vpop.f32.mrb[0].mxu0
    %v222 = vadd.f32 0.0, %v221
    %v223 = vpop.f32.mrb[0].mxu0
    %224 = vdwg.mxu0
    %225 = vst [vmem:[#allocation8] sm:$0xff] %v217
    %226 = vst [vmem:[#allocation8 + $0x8] sm:$0xff] %v222
    %s227 = scalar_lea.vmem [#allocation7], 16
    %v228 = vld [vmem:[%s227] sm:$0xff]
    %v229 = vld [vmem:[%s227 + $0x8] sm:$0xff]
    %230 = vmatprep.subr.mxu0 0.0
    %231 = vmatpush1.msra.mxu0 %v228
    %232 = vmatprep.subr.mxu0 0.0
    %233 = vmatpush1.msra.mxu0 %v229
    %234 = vmatprep.subr.mxu0 0.0
    %235 = vmatpush1.msra.mxu0 0.0
    %236 = vmatprep.subr.mxu0 0.0
    %237 = vmatpush1.msra.mxu0 0.0
    %238 = vmatprep.subr.mxu0 0.0
    %239 = vmatpush1.msra.mxu0 0.0
    %240 = vmatprep.subr.mxu0 0.0
    %241 = vmatpush1.msra.mxu0 0.0
    %242 = vmatprep.subr.mxu0 0.0
    %243 = vmatpush1.msra.mxu0 0.0
    %244 = vmatprep.subr.mxu0 0.0
    %245 = vmatpush1.msra.mxu0 0.0
    %246 = vmatprep.subr.mxu0 0.0
    %247 = vmatpush1.msra.mxu0 0.0
    %248 = vmatprep.subr.mxu0 0.0
    %249 = vmatpush1.msra.mxu0 0.0
    %250 = vmatprep.subr.mxu0 0.0
    %251 = vmatpush1.msra.mxu0 0.0
    %252 = vmatprep.subr.mxu0 0.0
    %253 = vmatpush1.msra.mxu0 0.0
    %254 = vmatprep.subr.mxu0 0.0
    %255 = vmatpush1.msra.mxu0 0.0
    %256 = vmatprep.subr.mxu0 0.0
    %257 = vmatpush1.msra.mxu0 0.0
    %258 = vmatprep.subr.mxu0 0.0
    %259 = vmatpush1.msra.mxu0 0.0
    %260 = vmatprep.subr.mxu0 0.0
    %261 = vmatpush1.msra.mxu0 0.0
    %262 = vmatprep.subr.mxu0 0.0
    %263 = vmatpush1.msra.mxu0 0.0
    %264 = vmatprep.subr.mxu0 0.0
    %265 = vmatpush1.msra.mxu0 0.0
    %266 = vmatprep.subr.mxu0 0.0
    %267 = vmatpush1.msra.mxu0 0.0
    %268 = vmatprep.subr.mxu0 0.0
    %269 = vmatpush1.msra.mxu0 0.0
    %270 = vmatprep.subr.mxu0 0.0
    %271 = vmatpush1.msra.mxu0 0.0
    %272 = vmatprep.subr.mxu0 0.0
    %273 = vmatpush1.msra.mxu0 0.0
    %274 = vmatprep.subr.mxu0 0.0
    %275 = vmatpush1.msra.mxu0 0.0
    %276 = vmatprep.subr.mxu0 0.0
    %277 = vmatpush1.msra.mxu0 0.0
    %278 = vmatprep.subr.mxu0 0.0
    %279 = vmatpush1.msra.mxu0 0.0
    %280 = vmatprep.subr.mxu0 0.0
    %281 = vmatpush1.msra.mxu0 0.0
    %282 = vmatprep.subr.mxu0 0.0
    %283 = vmatpush1.msra.mxu0 0.0
    %284 = vmatprep.subr.mxu0 0.0
    %285 = vmatpush1.msra.mxu0 0.0
    %286 = vmatprep.subr.mxu0 0.0
    %287 = vmatpush1.msra.mxu0 0.0
    %288 = vmatprep.subr.mxu0 0.0
    %289 = vmatpush1.msra.mxu0 0.0
    %290 = vmatprep.subr.mxu0 0.0
    %291 = vmatpush1.msra.mxu0 0.0
    %292 = vmatprep.subr.mxu0 0.0
    %293 = vmatpush1.msra.mxu0 0.0
    %294 = vmatprep.mubr.f32.mxu0 0.0
    %295 = vmatmul.mubr.f32.gmra.mrb[0].mxu0 %v64
    %v296 = vpop.f32.mrb[0].mxu0
    %v297 = vadd.f32 0.0, %v296
    %v298 = vpop.f32.mrb[0].mxu0
    %299 = vmatprep.mubr.f32.mxu0 0.0
    %300 = vmatmul.mubr.f32.gmra.mrb[0].mxu0 %v67
    %v301 = vpop.f32.mrb[0].mxu0
    %v302 = vadd.f32 0.0, %v301
    %v303 = vpop.f32.mrb[0].mxu0
    %304 = vdwg.mxu0
    %v306 = vsel %vm62, %v297, 0
    %v309 = vsel %vm62, %v302, 0
    %311 = vmatprep.subr.mxu0 0.0
    %312 = vmatpush1.msra.mxu0 %v58
    %313 = vmatprep.subr.mxu0 0.0
    %314 = vmatpush1.msra.mxu0 %v59
    %315 = vmatprep.subr.mxu0 0.0
    %316 = vmatpush1.msra.mxu0 0.0
    %317 = vmatprep.subr.mxu0 0.0
    %318 = vmatpush1.msra.mxu0 0.0
    %319 = vmatprep.subr.mxu0 0.0
    %320 = vmatpush1.msra.mxu0 0.0
    %321 = vmatprep.subr.mxu0 0.0
    %322 = vmatpush1.msra.mxu0 0.0
    %323 = vmatprep.subr.mxu0 0.0
    %324 = vmatpush1.msra.mxu0 0.0
    %325 = vmatprep.subr.mxu0 0.0
    %326 = vmatpush1.msra.mxu0 0.0
    %327 = vmatprep.subr.mxu0 0.0
    %328 = vmatpush1.msra.mxu0 0.0
    %329 = vmatprep.subr.mxu0 0.0
    %330 = vmatpush1.msra.mxu0 0.0
    %331 = vmatprep.subr.mxu0 0.0
    %332 = vmatpush1.msra.mxu0 0.0
    %333 = vmatprep.subr.mxu0 0.0
    %334 = vmatpush1.msra.mxu0 0.0
    %335 = vmatprep.subr.mxu0 0.0
    %336 = vmatpush1.msra.mxu0 0.0
    %337 = vmatprep.subr.mxu0 0.0
    %338 = vmatpush1.msra.mxu0 0.0
    %339 = vmatprep.subr.mxu0 0.0
    %340 = vmatpush1.msra.mxu0 0.0
    %341 = vmatprep.subr.mxu0 0.0
    %342 = vmatpush1.msra.mxu0 0.0
    %343 = vmatprep.subr.mxu0 0.0
    %344 = vmatpush1.msra.mxu0 0.0
    %345 = vmatprep.subr.mxu0 0.0
    %346 = vmatpush1.msra.mxu0 0.0
    %347 = vmatprep.subr.mxu0 0.0
    %348 = vmatpush1.msra.mxu0 0.0
    %349 = vmatprep.subr.mxu0 0.0
    %350 = vmatpush1.msra.mxu0 0.0
    %351 = vmatprep.subr.mxu0 0.0
    %352 = vmatpush1.msra.mxu0 0.0
    %353 = vmatprep.subr.mxu0 0.0
    %354 = vmatpush1.msra.mxu0 0.0
    %355 = vmatprep.subr.mxu0 0.0
    %356 = vmatpush1.msra.mxu0 0.0
    %357 = vmatprep.subr.mxu0 0.0
    %358 = vmatpush1.msra.mxu0 0.0
    %359 = vmatprep.subr.mxu0 0.0
    %360 = vmatpush1.msra.mxu0 0.0
    %361 = vmatprep.subr.mxu0 0.0
    %362 = vmatpush1.msra.mxu0 0.0
    %363 = vmatprep.subr.mxu0 0.0
    %364 = vmatpush1.msra.mxu0 0.0
    %365 = vmatprep.subr.mxu0 0.0
    %366 = vmatpush1.msra.mxu0 0.0
    %367 = vmatprep.subr.mxu0 0.0
    %368 = vmatpush1.msra.mxu0 0.0
    %369 = vmatprep.subr.mxu0 0.0
    %370 = vmatpush1.msra.mxu0 0.0
    %371 = vmatprep.subr.mxu0 0.0
    %372 = vmatpush1.msra.mxu0 0.0
    %373 = vmatprep.subr.mxu0 0.0
    %374 = vmatpush1.msra.mxu0 0.0
    %375 = vmatprep.mubr.f32.mxu0 0.0
    %376 = vmatmul.mubr.f32.gmra.mrb[0].mxu0 %v306
    %v377 = vpop.f32.mrb[0].mxu0
    %v378 = vadd.f32 0.0, %v377
    %v379 = vpop.f32.mrb[0].mxu0
    %380 = vmatprep.mubr.f32.mxu0 0.0
    %381 = vmatmul.mubr.f32.gmra.mrb[0].mxu0 %v309
    %v382 = vpop.f32.mrb[0].mxu0
    %v383 = vadd.f32 0.0, %v382
    %v384 = vpop.f32.mrb[0].mxu0
    %385 = vdwg.mxu0
    %s386 = scalar_lea.vmem [#allocation8], 16
    %387 = vst [vmem:[%s386] sm:$0xff] %v378
    %388 = vst [vmem:[%s386 + $0x8] sm:$0xff] %v383
    %s389 = scalar_lea.vmem [#allocation7], 32
    %v390 = vld [vmem:[%s389] sm:$0xff]
    %v391 = vld [vmem:[%s389 + $0x8] sm:$0xff]
    %392 = vmatprep.subr.mxu0 0.0
    %393 = vmatpush1.msra.mxu0 %v390
    %394 = vmatprep.subr.mxu0 0.0
    %395 = vmatpush1.msra.mxu0 %v391
    %396 = vmatprep.subr.mxu0 0.0
    %397 = vmatpush1.msra.mxu0 0.0
    %398 = vmatprep.subr.mxu0 0.0
    %399 = vmatpush1.msra.mxu0 0.0
    %400 = vmatprep.subr.mxu0 0.0
    %401 = vmatpush1.msra.mxu0 0.0
    %402 = vmatprep.subr.mxu0 0.0
    %403 = vmatpush1.msra.mxu0 0.0
    %404 = vmatprep.subr.mxu0 0.0
    %405 = vmatpush1.msra.mxu0 0.0
    %406 = vmatprep.subr.mxu0 0.0
    %407 = vmatpush1.msra.mxu0 0.0
    %408 = vmatprep.subr.mxu0 0.0
    %409 = vmatpush1.msra.mxu0 0.0
    %410 = vmatprep.subr.mxu0 0.0
    %411 = vmatpush1.msra.mxu0 0.0
    %412 = vmatprep.subr.mxu0 0.0
    %413 = vmatpush1.msra.mxu0 0.0
    %414 = vmatprep.subr.mxu0 0.0
    %415 = vmatpush1.msra.mxu0 0.0
    %416 = vmatprep.subr.mxu0 0.0
    %417 = vmatpush1.msra.mxu0 0.0
    %418 = vmatprep.subr.mxu0 0.0
    %419 = vmatpush1.msra.mxu0 0.0
    %420 = vmatprep.subr.mxu0 0.0
    %421 = vmatpush1.msra.mxu0 0.0
    %422 = vmatprep.subr.mxu0 0.0
    %423 = vmatpush1.msra.mxu0 0.0
    %424 = vmatprep.subr.mxu0 0.0
    %425 = vmatpush1.msra.mxu0 0.0
    %426 = vmatprep.subr.mxu0 0.0
    %427 = vmatpush1.msra.mxu0 0.0
    %428 = vmatprep.subr.mxu0 0.0
    %429 = vmatpush1.msra.mxu0 0.0
    %430 = vmatprep.subr.mxu0 0.0
    %431 = vmatpush1.msra.mxu0 0.0
    %432 = vmatprep.subr.mxu0 0.0
    %433 = vmatpush1.msra.mxu0 0.0
    %434 = vmatprep.subr.mxu0 0.0
    %435 = vmatpush1.msra.mxu0 0.0
    %436 = vmatprep.subr.mxu0 0.0
    %437 = vmatpush1.msra.mxu0 0.0
    %438 = vmatprep.subr.mxu0 0.0
    %439 = vmatpush1.msra.mxu0 0.0
    %440 = vmatprep.subr.mxu0 0.0
    %441 = vmatpush1.msra.mxu0 0.0
    %442 = vmatprep.subr.mxu0 0.0
    %443 = vmatpush1.msra.mxu0 0.0
    %444 = vmatprep.subr.mxu0 0.0
    %445 = vmatpush1.msra.mxu0 0.0
    %446 = vmatprep.subr.mxu0 0.0
    %447 = vmatpush1.msra.mxu0 0.0
    %448 = vmatprep.subr.mxu0 0.0
    %449 = vmatpush1.msra.mxu0 0.0
    %450 = vmatprep.subr.mxu0 0.0
    %451 = vmatpush1.msra.mxu0 0.0
    %452 = vmatprep.subr.mxu0 0.0
    %453 = vmatpush1.msra.mxu0 0.0
    %454 = vmatprep.subr.mxu0 0.0
    %455 = vmatpush1.msra.mxu0 0.0
    %456 = vmatprep.mubr.f32.mxu0 0.0
    %457 = vmatmul.mubr.f32.gmra.mrb[0].mxu0 %v64
    %v458 = vpop.f32.mrb[0].mxu0
    %v459 = vadd.f32 0.0, %v458
    %v460 = vpop.f32.mrb[0].mxu0
    %461 = vmatprep.mubr.f32.mxu0 0.0
    %462 = vmatmul.mubr.f32.gmra.mrb[0].mxu0 %v67
    %v463 = vpop.f32.mrb[0].mxu0
    %v464 = vadd.f32 0.0, %v463
    %v465 = vpop.f32.mrb[0].mxu0
    %466 = vdwg.mxu0
    %v468 = vsel %vm62, %v459, 0
    %v471 = vsel %vm62, %v464, 0
    %473 = vmatprep.subr.mxu0 0.0
    %474 = vmatpush1.msra.mxu0 %v58
    %475 = vmatprep.subr.mxu0 0.0
    %476 = vmatpush1.msra.mxu0 %v59
    %477 = vmatprep.subr.mxu0 0.0
    %478 = vmatpush1.msra.mxu0 0.0
    %479 = vmatprep.subr.mxu0 0.0
    %480 = vmatpush1.msra.mxu0 0.0
    %481 = vmatprep.subr.mxu0 0.0
    %482 = vmatpush1.msra.mxu0 0.0
    %483 = vmatprep.subr.mxu0 0.0
    %484 = vmatpush1.msra.mxu0 0.0
    %485 = vmatprep.subr.mxu0 0.0
    %486 = vmatpush1.msra.mxu0 0.0
    %487 = vmatprep.subr.mxu0 0.0
    %488 = vmatpush1.msra.mxu0 0.0
    %489 = vmatprep.subr.mxu0 0.0
    %490 = vmatpush1.msra.mxu0 0.0
    %491 = vmatprep.subr.mxu0 0.0
    %492 = vmatpush1.msra.mxu0 0.0
    %493 = vmatprep.subr.mxu0 0.0
    %494 = vmatpush1.msra.mxu0 0.0
    %495 = vmatprep.subr.mxu0 0.0
    %496 = vmatpush1.msra.mxu0 0.0
    %497 = vmatprep.subr.mxu0 0.0
    %498 = vmatpush1.msra.mxu0 0.0
    %499 = vmatprep.subr.mxu0 0.0
    %500 = vmatpush1.msra.mxu0 0.0
    %501 = vmatprep.subr.mxu0 0.0
    %502 = vmatpush1.msra.mxu0 0.0
    %503 = vmatprep.subr.mxu0 0.0
    %504 = vmatpush1.msra.mxu0 0.0
    %505 = vmatprep.subr.mxu0 0.0
    %506 = vmatpush1.msra.mxu0 0.0
    %507 = vmatprep.subr.mxu0 0.0
    %508 = vmatpush1.msra.mxu0 0.0
    %509 = vmatprep.subr.mxu0 0.0
    %510 = vmatpush1.msra.mxu0 0.0
    %511 = vmatprep.subr.mxu0 0.0
    %512 = vmatpush1.msra.mxu0 0.0
    %513 = vmatprep.subr.mxu0 0.0
    %514 = vmatpush1.msra.mxu0 0.0
    %515 = vmatprep.subr.mxu0 0.0
    %516 = vmatpush1.msra.mxu0 0.0
    %517 = vmatprep.subr.mxu0 0.0
    %518 = vmatpush1.msra.mxu0 0.0
    %519 = vmatprep.subr.mxu0 0.0
    %520 = vmatpush1.msra.mxu0 0.0
    %521 = vmatprep.subr.mxu0 0.0
    %522 = vmatpush1.msra.mxu0 0.0
    %523 = vmatprep.subr.mxu0 0.0
    %524 = vmatpush1.msra.mxu0 0.0
    %525 = vmatprep.subr.mxu0 0.0
    %526 = vmatpush1.msra.mxu0 0.0
    %527 = vmatprep.subr.mxu0 0.0
    %528 = vmatpush1.msra.mxu0 0.0
    %529 = vmatprep.subr.mxu0 0.0
    %530 = vmatpush1.msra.mxu0 0.0
    %531 = vmatprep.subr.mxu0 0.0
    %532 = vmatpush1.msra.mxu0 0.0
    %533 = vmatprep.subr.mxu0 0.0
    %534 = vmatpush1.msra.mxu0 0.0
    %535 = vmatprep.subr.mxu0 0.0
    %536 = vmatpush1.msra.mxu0 0.0
    %537 = vmatprep.mubr.f32.mxu0 0.0
    %538 = vmatmul.mubr.f32.gmra.mrb[0].mxu0 %v468
    %v539 = vpop.f32.mrb[0].mxu0
    %v540 = vadd.f32 0.0, %v539
    %v541 = vpop.f32.mrb[0].mxu0
    %542 = vmatprep.mubr.f32.mxu0 0.0
    %543 = vmatmul.mubr.f32.gmra.mrb[0].mxu0 %v471
    %v544 = vpop.f32.mrb[0].mxu0
    %v545 = vadd.f32 0.0, %v544
    %v546 = vpop.f32.mrb[0].mxu0
    %547 = vdwg.mxu0
    %s548 = scalar_lea.vmem [#allocation8], 32
    %549 = vst [vmem:[%s548] sm:$0xff] %v540
    %550 = vst [vmem:[%s548 + $0x8] sm:$0xff] %v545
    %s551 = scalar_lea.vmem [#allocation7], 48
    %v552 = vld [vmem:[%s551] sm:$0xff]
    %v553 = vld [vmem:[%s551 + $0x8] sm:$0xff]
    %554 = vmatprep.subr.mxu0 0.0
    %555 = vmatpush1.msra.mxu0 %v552
    %556 = vmatprep.subr.mxu0 0.0
    %557 = vmatpush1.msra.mxu0 %v553
    %558 = vmatprep.subr.mxu0 0.0
    %559 = vmatpush1.msra.mxu0 0.0
    %560 = vmatprep.subr.mxu0 0.0
    %561 = vmatpush1.msra.mxu0 0.0
    %562 = vmatprep.subr.mxu0 0.0
    %563 = vmatpush1.msra.mxu0 0.0
    %564 = vmatprep.subr.mxu0 0.0
    %565 = vmatpush1.msra.mxu0 0.0
    %566 = vmatprep.subr.mxu0 0.0
    %567 = vmatpush1.msra.mxu0 0.0
    %568 = vmatprep.subr.mxu0 0.0
    %569 = vmatpush1.msra.mxu0 0.0
    %570 = vmatprep.subr.mxu0 0.0
    %571 = vmatpush1.msra.mxu0 0.0
    %572 = vmatprep.subr.mxu0 0.0
    %573 = vmatpush1.msra.mxu0 0.0
    %574 = vmatprep.subr.mxu0 0.0
    %575 = vmatpush1.msra.mxu0 0.0
    %576 = vmatprep.subr.mxu0 0.0
    %577 = vmatpush1.msra.mxu0 0.0
    %578 = vmatprep.subr.mxu0 0.0
    %579 = vmatpush1.msra.mxu0 0.0
    %580 = vmatprep.subr.mxu0 0.0
    %581 = vmatpush1.msra.mxu0 0.0
    %582 = vmatprep.subr.mxu0 0.0
    %583 = vmatpush1.msra.mxu0 0.0
    %584 = vmatprep.subr.mxu0 0.0
    %585 = vmatpush1.msra.mxu0 0.0
    %586 = vmatprep.subr.mxu0 0.0
    %587 = vmatpush1.msra.mxu0 0.0
    %588 = vmatprep.subr.mxu0 0.0
    %589 = vmatpush1.msra.mxu0 0.0
    %590 = vmatprep.subr.mxu0 0.0
    %591 = vmatpush1.msra.mxu0 0.0
    %592 = vmatprep.subr.mxu0 0.0
    %593 = vmatpush1.msra.mxu0 0.0
    %594 = vmatprep.subr.mxu0 0.0
    %595 = vmatpush1.msra.mxu0 0.0
    %596 = vmatprep.subr.mxu0 0.0
    %597 = vmatpush1.msra.mxu0 0.0
    %598 = vmatprep.subr.mxu0 0.0
    %599 = vmatpush1.msra.mxu0 0.0
    %600 = vmatprep.subr.mxu0 0.0
    %601 = vmatpush1.msra.mxu0 0.0
    %602 = vmatprep.subr.mxu0 0.0
    %603 = vmatpush1.msra.mxu0 0.0
    %604 = vmatprep.subr.mxu0 0.0
    %605 = vmatpush1.msra.mxu0 0.0
    %606 = vmatprep.subr.mxu0 0.0
    %607 = vmatpush1.msra.mxu0 0.0
    %608 = vmatprep.subr.mxu0 0.0
    %609 = vmatpush1.msra.mxu0 0.0
    %610 = vmatprep.subr.mxu0 0.0
    %611 = vmatpush1.msra.mxu0 0.0
    %612 = vmatprep.subr.mxu0 0.0
    %613 = vmatpush1.msra.mxu0 0.0
    %614 = vmatprep.subr.mxu0 0.0
    %615 = vmatpush1.msra.mxu0 0.0
    %616 = vmatprep.subr.mxu0 0.0
    %617 = vmatpush1.msra.mxu0 0.0
    %618 = vmatprep.mubr.f32.mxu0 0.0
    %619 = vmatmul.mubr.f32.gmra.mrb[0].mxu0 %v64
    %v620 = vpop.f32.mrb[0].mxu0
    %v621 = vadd.f32 0.0, %v620
    %v622 = vpop.f32.mrb[0].mxu0
    %623 = vmatprep.mubr.f32.mxu0 0.0
    %624 = vmatmul.mubr.f32.gmra.mrb[0].mxu0 %v67
    %v625 = vpop.f32.mrb[0].mxu0
    %v626 = vadd.f32 0.0, %v625
    %v627 = vpop.f32.mrb[0].mxu0
    %628 = vdwg.mxu0
    %v630 = vsel %vm62, %v621, 0
    %v633 = vsel %vm62, %v626, 0
    %635 = vmatprep.subr.mxu0 0.0
    %636 = vmatpush1.msra.mxu0 %v58
    %637 = vmatprep.subr.mxu0 0.0
    %638 = vmatpush1.msra.mxu0 %v59
    %639 = vmatprep.subr.mxu0 0.0
    %640 = vmatpush1.msra.mxu0 0.0
    %641 = vmatprep.subr.mxu0 0.0
    %642 = vmatpush1.msra.mxu0 0.0
    %643 = vmatprep.subr.mxu0 0.0
    %644 = vmatpush1.msra.mxu0 0.0
    %645 = vmatprep.subr.mxu0 0.0
    %646 = vmatpush1.msra.mxu0 0.0
    %647 = vmatprep.subr.mxu0 0.0
    %648 = vmatpush1.msra.mxu0 0.0
    %649 = vmatprep.subr.mxu0 0.0
    %650 = vmatpush1.msra.mxu0 0.0
    %651 = vmatprep.subr.mxu0 0.0
    %652 = vmatpush1.msra.mxu0 0.0
    %653 = vmatprep.subr.mxu0 0.0
    %654 = vmatpush1.msra.mxu0 0.0
    %655 = vmatprep.subr.mxu0 0.0
    %656 = vmatpush1.msra.mxu0 0.0
    %657 = vmatprep.subr.mxu0 0.0
    %658 = vmatpush1.msra.mxu0 0.0
    %659 = vmatprep.subr.mxu0 0.0
    %660 = vmatpush1.msra.mxu0 0.0
    %661 = vmatprep.subr.mxu0 0.0
    %662 = vmatpush1.msra.mxu0 0.0
    %663 = vmatprep.subr.mxu0 0.0
    %664 = vmatpush1.msra.mxu0 0.0
    %665 = vmatprep.subr.mxu0 0.0
    %666 = vmatpush1.msra.mxu0 0.0
    %667 = vmatprep.subr.mxu0 0.0
    %668 = vmatpush1.msra.mxu0 0.0
    %669 = vmatprep.subr.mxu0 0.0
    %670 = vmatpush1.msra.mxu0 0.0
    %671 = vmatprep.subr.mxu0 0.0
    %672 = vmatpush1.msra.mxu0 0.0
    %673 = vmatprep.subr.mxu0 0.0
    %674 = vmatpush1.msra.mxu0 0.0
    %675 = vmatprep.subr.mxu0 0.0
    %676 = vmatpush1.msra.mxu0 0.0
    %677 = vmatprep.subr.mxu0 0.0
    %678 = vmatpush1.msra.mxu0 0.0
    %679 = vmatprep.subr.mxu0 0.0
    %680 = vmatpush1.msra.mxu0 0.0
    %681 = vmatprep.subr.mxu0 0.0
    %682 = vmatpush1.msra.mxu0 0.0
    %683 = vmatprep.subr.mxu0 0.0
    %684 = vmatpush1.msra.mxu0 0.0
    %685 = vmatprep.subr.mxu0 0.0
    %686 = vmatpush1.msra.mxu0 0.0
    %687 = vmatprep.subr.mxu0 0.0
    %688 = vmatpush1.msra.mxu0 0.0
    %689 = vmatprep.subr.mxu0 0.0
    %690 = vmatpush1.msra.mxu0 0.0
    %691 = vmatprep.subr.mxu0 0.0
    %692 = vmatpush1.msra.mxu0 0.0
    %693 = vmatprep.subr.mxu0 0.0
    %694 = vmatpush1.msra.mxu0 0.0
    %695 = vmatprep.subr.mxu0 0.0
    %696 = vmatpush1.msra.mxu0 0.0
    %697 = vmatprep.subr.mxu0 0.0
    %698 = vmatpush1.msra.mxu0 0.0
    %699 = vmatprep.mubr.f32.mxu0 0.0
    %700 = vmatmul.mubr.f32.gmra.mrb[0].mxu0 %v630
    %v701 = vpop.f32.mrb[0].mxu0
    %v702 = vadd.f32 0.0, %v701
    %v703 = vpop.f32.mrb[0].mxu0
    %704 = vmatprep.mubr.f32.mxu0 0.0
    %705 = vmatmul.mubr.f32.gmra.mrb[0].mxu0 %v633
    %v706 = vpop.f32.mrb[0].mxu0
    %v707 = vadd.f32 0.0, %v706
    %v708 = vpop.f32.mrb[0].mxu0
    %709 = vdwg.mxu0
    %s710 = scalar_lea.vmem [#allocation8], 48
    %711 = vst [vmem:[%s710] sm:$0xff] %v702
    %712 = vst [vmem:[%s710 + $0x8] sm:$0xff] %v707
    %s713 = scalar_lea.vmem [#allocation7], 64
    %v714 = vld [vmem:[%s713] sm:$0xff]
    %v715 = vld [vmem:[%s713 + $0x8] sm:$0xff]
    %716 = vmatprep.subr.mxu0 0.0
    %717 = vmatpush1.msra.mxu0 %v714
    %718 = vmatprep.subr.mxu0 0.0
    %719 = vmatpush1.msra.mxu0 %v715
    %720 = vmatprep.subr.mxu0 0.0
    %721 = vmatpush1.msra.mxu0 0.0
    %722 = vmatprep.subr.mxu0 0.0
    %723 = vmatpush1.msra.mxu0 0.0
    %724 = vmatprep.subr.mxu0 0.0
    %725 = vmatpush1.msra.mxu0 0.0
    %726 = vmatprep.subr.mxu0 0.0
    %727 = vmatpush1.msra.mxu0 0.0
    %728 = vmatprep.subr.mxu0 0.0
    %729 = vmatpush1.msra.mxu0 0.0
    %730 = vmatprep.subr.mxu0 0.0
    %731 = vmatpush1.msra.mxu0 0.0
    %732 = vmatprep.subr.mxu0 0.0
    %733 = vmatpush1.msra.mxu0 0.0
    %734 = vmatprep.subr.mxu0 0.0
    %735 = vmatpush1.msra.mxu0 0.0
    %736 = vmatprep.subr.mxu0 0.0
    %737 = vmatpush1.msra.mxu0 0.0
    %738 = vmatprep.subr.mxu0 0.0
    %739 = vmatpush1.msra.mxu0 0.0
    %740 = vmatprep.subr.mxu0 0.0
    %741 = vmatpush1.msra.mxu0 0.0
    %742 = vmatprep.subr.mxu0 0.0
    %743 = vmatpush1.msra.mxu0 0.0
    %744 = vmatprep.subr.mxu0 0.0
    %745 = vmatpush1.msra.mxu0 0.0
    %746 = vmatprep.subr.mxu0 0.0
    %747 = vmatpush1.msra.mxu0 0.0
    %748 = vmatprep.subr.mxu0 0.0
    %749 = vmatpush1.msra.mxu0 0.0
    %750 = vmatprep.subr.mxu0 0.0
    %751 = vmatpush1.msra.mxu0 0.0
    %752 = vmatprep.subr.mxu0 0.0
    %753 = vmatpush1.msra.mxu0 0.0
    %754 = vmatprep.subr.mxu0 0.0
    %755 = vmatpush1.msra.mxu0 0.0
    %756 = vmatprep.subr.mxu0 0.0
    %757 = vmatpush1.msra.mxu0 0.0
    %758 = vmatprep.subr.mxu0 0.0
    %759 = vmatpush1.msra.mxu0 0.0
    %760 = vmatprep.subr.mxu0 0.0
    %761 = vmatpush1.msra.mxu0 0.0
    %762 = vmatprep.subr.mxu0 0.0
    %763 = vmatpush1.msra.mxu0 0.0
    %764 = vmatprep.subr.mxu0 0.0
    %765 = vmatpush1.msra.mxu0 0.0
    %766 = vmatprep.subr.mxu0 0.0
    %767 = vmatpush1.msra.mxu0 0.0
    %768 = vmatprep.subr.mxu0 0.0
    %769 = vmatpush1.msra.mxu0 0.0
    %770 = vmatprep.subr.mxu0 0.0
    %771 = vmatpush1.msra.mxu0 0.0
    %772 = vmatprep.subr.mxu0 0.0
    %773 = vmatpush1.msra.mxu0 0.0
    %774 = vmatprep.subr.mxu0 0.0
    %775 = vmatpush1.msra.mxu0 0.0
    %776 = vmatprep.subr.mxu0 0.0
    %777 = vmatpush1.msra.mxu0 0.0
    %778 = vmatprep.subr.mxu0 0.0
    %779 = vmatpush1.msra.mxu0 0.0
    %780 = vmatprep.mubr.f32.mxu0 0.0
    %781 = vmatmul.mubr.f32.gmra.mrb[0].mxu0 %v64
    %v782 = vpop.f32.mrb[0].mxu0
    %v783 = vadd.f32 0.0, %v782
    %v784 = vpop.f32.mrb[0].mxu0
    %785 = vmatprep.mubr.f32.mxu0 0.0
    %786 = vmatmul.mubr.f32.gmra.mrb[0].mxu0 %v67
    %v787 = vpop.f32.mrb[0].mxu0
    %v788 = vadd.f32 0.0, %v787
    %v789 = vpop.f32.mrb[0].mxu0
    %790 = vdwg.mxu0
    %v792 = vsel %vm62, %v783, 0
    %v795 = vsel %vm62, %v788, 0
    %797 = vmatprep.subr.mxu0 0.0
    %798 = vmatpush1.msra.mxu0 %v58
    %799 = vmatprep.subr.mxu0 0.0
    %800 = vmatpush1.msra.mxu0 %v59
    %801 = vmatprep.subr.mxu0 0.0
    %802 = vmatpush1.msra.mxu0 0.0
    %803 = vmatprep.subr.mxu0 0.0
    %804 = vmatpush1.msra.mxu0 0.0
    %805 = vmatprep.subr.mxu0 0.0
    %806 = vmatpush1.msra.mxu0 0.0
    %807 = vmatprep.subr.mxu0 0.0
    %808 = vmatpush1.msra.mxu0 0.0
    %809 = vmatprep.subr.mxu0 0.0
    %810 = vmatpush1.msra.mxu0 0.0
    %811 = vmatprep.subr.mxu0 0.0
    %812 = vmatpush1.msra.mxu0 0.0
    %813 = vmatprep.subr.mxu0 0.0
    %814 = vmatpush1.msra.mxu0 0.0
    %815 = vmatprep.subr.mxu0 0.0
    %816 = vmatpush1.msra.mxu0 0.0
    %817 = vmatprep.subr.mxu0 0.0
    %818 = vmatpush1.msra.mxu0 0.0
    %819 = vmatprep.subr.mxu0 0.0
    %820 = vmatpush1.msra.mxu0 0.0
    %821 = vmatprep.subr.mxu0 0.0
    %822 = vmatpush1.msra.mxu0 0.0
    %823 = vmatprep.subr.mxu0 0.0
    %824 = vmatpush1.msra.mxu0 0.0
    %825 = vmatprep.subr.mxu0 0.0
    %826 = vmatpush1.msra.mxu0 0.0
    %827 = vmatprep.subr.mxu0 0.0
    %828 = vmatpush1.msra.mxu0 0.0
    %829 = vmatprep.subr.mxu0 0.0
    %830 = vmatpush1.msra.mxu0 0.0
    %831 = vmatprep.subr.mxu0 0.0
    %832 = vmatpush1.msra.mxu0 0.0
    %833 = vmatprep.subr.mxu0 0.0
    %834 = vmatpush1.msra.mxu0 0.0
    %835 = vmatprep.subr.mxu0 0.0
    %836 = vmatpush1.msra.mxu0 0.0
    %837 = vmatprep.subr.mxu0 0.0
    %838 = vmatpush1.msra.mxu0 0.0
    %839 = vmatprep.subr.mxu0 0.0
    %840 = vmatpush1.msra.mxu0 0.0
    %841 = vmatprep.subr.mxu0 0.0
    %842 = vmatpush1.msra.mxu0 0.0
    %843 = vmatprep.subr.mxu0 0.0
    %844 = vmatpush1.msra.mxu0 0.0
    %845 = vmatprep.subr.mxu0 0.0
    %846 = vmatpush1.msra.mxu0 0.0
    %847 = vmatprep.subr.mxu0 0.0
    %848 = vmatpush1.msra.mxu0 0.0
    %849 = vmatprep.subr.mxu0 0.0
    %850 = vmatpush1.msra.mxu0 0.0
    %851 = vmatprep.subr.mxu0 0.0
    %852 = vmatpush1.msra.mxu0 0.0
    %853 = vmatprep.subr.mxu0 0.0
    %854 = vmatpush1.msra.mxu0 0.0
    %855 = vmatprep.subr.mxu0 0.0
    %856 = vmatpush1.msra.mxu0 0.0
    %857 = vmatprep.subr.mxu0 0.0
    %858 = vmatpush1.msra.mxu0 0.0
    %859 = vmatprep.subr.mxu0 0.0
    %860 = vmatpush1.msra.mxu0 0.0
    %861 = vmatprep.mubr.f32.mxu0 0.0
    %862 = vmatmul.mubr.f32.gmra.mrb[0].mxu0 %v792
    %v863 = vpop.f32.mrb[0].mxu0
    %v864 = vadd.f32 0.0, %v863
    %v865 = vpop.f32.mrb[0].mxu0
    %866 = vmatprep.mubr.f32.mxu0 0.0
    %867 = vmatmul.mubr.f32.gmra.mrb[0].mxu0 %v795
    %v868 = vpop.f32.mrb[0].mxu0
    %v869 = vadd.f32 0.0, %v868
    %v870 = vpop.f32.mrb[0].mxu0
    %871 = vdwg.mxu0
    %s872 = scalar_lea.vmem [#allocation8], 64
    %873 = vst [vmem:[%s872] sm:$0xff] %v864
    %874 = vst [vmem:[%s872 + $0x8] sm:$0xff] %v869
    %s875 = scalar_lea.vmem [#allocation7], 80
    %v876 = vld [vmem:[%s875] sm:$0xff]
    %v877 = vld [vmem:[%s875 + $0x8] sm:$0xff]
    %878 = vmatprep.subr.mxu0 0.0
    %879 = vmatpush1.msra.mxu0 %v876
    %880 = vmatprep.subr.mxu0 0.0
    %881 = vmatpush1.msra.mxu0 %v877
    %882 = vmatprep.subr.mxu0 0.0
    %883 = vmatpush1.msra.mxu0 0.0
    %884 = vmatprep.subr.mxu0 0.0
    %885 = vmatpush1.msra.mxu0 0.0
    %886 = vmatprep.subr.mxu0 0.0
    %887 = vmatpush1.msra.mxu0 0.0
    %888 = vmatprep.subr.mxu0 0.0
    %889 = vmatpush1.msra.mxu0 0.0
    %890 = vmatprep.subr.mxu0 0.0
    %891 = vmatpush1.msra.mxu0 0.0
    %892 = vmatprep.subr.mxu0 0.0
    %893 = vmatpush1.msra.mxu0 0.0
    %894 = vmatprep.subr.mxu0 0.0
    %895 = vmatpush1.msra.mxu0 0.0
    %896 = vmatprep.subr.mxu0 0.0
    %897 = vmatpush1.msra.mxu0 0.0
    %898 = vmatprep.subr.mxu0 0.0
    %899 = vmatpush1.msra.mxu0 0.0
    %900 = vmatprep.subr.mxu0 0.0
    %901 = vmatpush1.msra.mxu0 0.0
    %902 = vmatprep.subr.mxu0 0.0
    %903 = vmatpush1.msra.mxu0 0.0
    %904 = vmatprep.subr.mxu0 0.0
    %905 = vmatpush1.msra.mxu0 0.0
    %906 = vmatprep.subr.mxu0 0.0
    %907 = vmatpush1.msra.mxu0 0.0
    %908 = vmatprep.subr.mxu0 0.0
    %909 = vmatpush1.msra.mxu0 0.0
    %910 = vmatprep.subr.mxu0 0.0
    %911 = vmatpush1.msra.mxu0 0.0
    %912 = vmatprep.subr.mxu0 0.0
    %913 = vmatpush1.msra.mxu0 0.0
    %914 = vmatprep.subr.mxu0 0.0
    %915 = vmatpush1.msra.mxu0 0.0
    %916 = vmatprep.subr.mxu0 0.0
    %917 = vmatpush1.msra.mxu0 0.0
    %918 = vmatprep.subr.mxu0 0.0
    %919 = vmatpush1.msra.mxu0 0.0
    %920 = vmatprep.subr.mxu0 0.0
    %921 = vmatpush1.msra.mxu0 0.0
    %922 = vmatprep.subr.mxu0 0.0
    %923 = vmatpush1.msra.mxu0 0.0
    %924 = vmatprep.subr.mxu0 0.0
    %925 = vmatpush1.msra.mxu0 0.0
    %926 = vmatprep.subr.mxu0 0.0
    %927 = vmatpush1.msra.mxu0 0.0
    %928 = vmatprep.subr.mxu0 0.0
    %929 = vmatpush1.msra.mxu0 0.0
    %930 = vmatprep.subr.mxu0 0.0
    %931 = vmatpush1.msra.mxu0 0.0
    %932 = vmatprep.subr.mxu0 0.0
    %933 = vmatpush1.msra.mxu0 0.0
    %934 = vmatprep.subr.mxu0 0.0
    %935 = vmatpush1.msra.mxu0 0.0
    %936 = vmatprep.subr.mxu0 0.0
    %937 = vmatpush1.msra.mxu0 0.0
    %938 = vmatprep.subr.mxu0 0.0
    %939 = vmatpush1.msra.mxu0 0.0
    %940 = vmatprep.subr.mxu0 0.0
    %941 = vmatpush1.msra.mxu0 0.0
    %942 = vmatprep.mubr.f32.mxu0 0.0
    %943 = vmatmul.mubr.f32.gmra.mrb[0].mxu0 %v64
    %v944 = vpop.f32.mrb[0].mxu0
    %v945 = vadd.f32 0.0, %v944
    %v946 = vpop.f32.mrb[0].mxu0
    %947 = vmatprep.mubr.f32.mxu0 0.0
    %948 = vmatmul.mubr.f32.gmra.mrb[0].mxu0 %v67
    %v949 = vpop.f32.mrb[0].mxu0
    %v950 = vadd.f32 0.0, %v949
    %v951 = vpop.f32.mrb[0].mxu0
    %952 = vdwg.mxu0
    %v954 = vsel %vm62, %v945, 0
    %v957 = vsel %vm62, %v950, 0
    %959 = vmatprep.subr.mxu0 0.0
    %960 = vmatpush1.msra.mxu0 %v58
    %961 = vmatprep.subr.mxu0 0.0
    %962 = vmatpush1.msra.mxu0 %v59
    %963 = vmatprep.subr.mxu0 0.0
    %964 = vmatpush1.msra.mxu0 0.0
    %965 = vmatprep.subr.mxu0 0.0
    %966 = vmatpush1.msra.mxu0 0.0
    %967 = vmatprep.subr.mxu0 0.0
    %968 = vmatpush1.msra.mxu0 0.0
    %969 = vmatprep.subr.mxu0 0.0
    %970 = vmatpush1.msra.mxu0 0.0
    %971 = vmatprep.subr.mxu0 0.0
    %972 = vmatpush1.msra.mxu0 0.0
    %973 = vmatprep.subr.mxu0 0.0
    %974 = vmatpush1.msra.mxu0 0.0
    %975 = vmatprep.subr.mxu0 0.0
    %976 = vmatpush1.msra.mxu0 0.0
    %977 = vmatprep.subr.mxu0 0.0
    %978 = vmatpush1.msra.mxu0 0.0
    %979 = vmatprep.subr.mxu0 0.0
    %980 = vmatpush1.msra.mxu0 0.0
    %981 = vmatprep.subr.mxu0 0.0
    %982 = vmatpush1.msra.mxu0 0.0
    %983 = vmatprep.subr.mxu0 0.0
    %984 = vmatpush1.msra.mxu0 0.0
    %985 = vmatprep.subr.mxu0 0.0
    %986 = vmatpush1.msra.mxu0 0.0
    %987 = vmatprep.subr.mxu0 0.0
    %988 = vmatpush1.msra.mxu0 0.0
    %989 = vmatprep.subr.mxu0 0.0
    %990 = vmatpush1.msra.mxu0 0.0
    %991 = vmatprep.subr.mxu0 0.0
    %992 = vmatpush1.msra.mxu0 0.0
    %993 = vmatprep.subr.mxu0 0.0
    %994 = vmatpush1.msra.mxu0 0.0
    %995 = vmatprep.subr.mxu0 0.0
    %996 = vmatpush1.msra.mxu0 0.0
    %997 = vmatprep.subr.mxu0 0.0
    %998 = vmatpush1.msra.mxu0 0.0
    %999 = vmatprep.subr.mxu0 0.0
    %1000 = vmatpush1.msra.mxu0 0.0
    %1001 = vmatprep.subr.mxu0 0.0
    %1002 = vmatpush1.msra.mxu0 0.0
    %1003 = vmatprep.subr.mxu0 0.0
    %1004 = vmatpush1.msra.mxu0 0.0
    %1005 = vmatprep.subr.mxu0 0.0
    %1006 = vmatpush1.msra.mxu0 0.0
    %1007 = vmatprep.subr.mxu0 0.0
    %1008 = vmatpush1.msra.mxu0 0.0
    %1009 = vmatprep.subr.mxu0 0.0
    %1010 = vmatpush1.msra.mxu0 0.0
    %1011 = vmatprep.subr.mxu0 0.0
    %1012 = vmatpush1.msra.mxu0 0.0
    %1013 = vmatprep.subr.mxu0 0.0
    %1014 = vmatpush1.msra.mxu0 0.0
    %1015 = vmatprep.subr.mxu0 0.0
    %1016 = vmatpush1.msra.mxu0 0.0
    %1017 = vmatprep.subr.mxu0 0.0
    %1018 = vmatpush1.msra.mxu0 0.0
    %1019 = vmatprep.subr.mxu0 0.0
    %1020 = vmatpush1.msra.mxu0 0.0
    %1021 = vmatprep.subr.mxu0 0.0
    %1022 = vmatpush1.msra.mxu0 0.0
    %1023 = vmatprep.mubr.f32.mxu0 0.0
    %1024 = vmatmul.mubr.f32.gmra.mrb[0].mxu0 %v954
    %v1025 = vpop.f32.mrb[0].mxu0
    %v1026 = vadd.f32 0.0, %v1025
    %v1027 = vpop.f32.mrb[0].mxu0
    %1028 = vmatprep.mubr.f32.mxu0 0.0
    %1029 = vmatmul.mubr.f32.gmra.mrb[0].mxu0 %v957
    %v1030 = vpop.f32.mrb[0].mxu0
    %v1031 = vadd.f32 0.0, %v1030
    %v1032 = vpop.f32.mrb[0].mxu0
    %1033 = vdwg.mxu0
    %s1034 = scalar_lea.vmem [#allocation8], 80
    %1035 = vst [vmem:[%s1034] sm:$0xff] %v1026
    %1036 = vst [vmem:[%s1034 + $0x8] sm:$0xff] %v1031
    %s1037 = scalar_lea.vmem [#allocation7], 96
    %v1038 = vld [vmem:[%s1037] sm:$0xff]
    %v1039 = vld [vmem:[%s1037 + $0x8] sm:$0xff]
    %1040 = vmatprep.subr.mxu0 0.0
    %1041 = vmatpush1.msra.mxu0 %v1038
    %1042 = vmatprep.subr.mxu0 0.0
    %1043 = vmatpush1.msra.mxu0 %v1039
    %1044 = vmatprep.subr.mxu0 0.0
    %1045 = vmatpush1.msra.mxu0 0.0
    %1046 = vmatprep.subr.mxu0 0.0
    %1047 = vmatpush1.msra.mxu0 0.0
    %1048 = vmatprep.subr.mxu0 0.0
    %1049 = vmatpush1.msra.mxu0 0.0
    %1050 = vmatprep.subr.mxu0 0.0
    %1051 = vmatpush1.msra.mxu0 0.0
    %1052 = vmatprep.subr.mxu0 0.0
    %1053 = vmatpush1.msra.mxu0 0.0
    %1054 = vmatprep.subr.mxu0 0.0
    %1055 = vmatpush1.msra.mxu0 0.0
    %1056 = vmatprep.subr.mxu0 0.0
    %1057 = vmatpush1.msra.mxu0 0.0
    %1058 = vmatprep.subr.mxu0 0.0
    %1059 = vmatpush1.msra.mxu0 0.0
    %1060 = vmatprep.subr.mxu0 0.0
    %1061 = vmatpush1.msra.mxu0 0.0
    %1062 = vmatprep.subr.mxu0 0.0
    %1063 = vmatpush1.msra.mxu0 0.0
    %1064 = vmatprep.subr.mxu0 0.0
    %1065 = vmatpush1.msra.mxu0 0.0
    %1066 = vmatprep.subr.mxu0 0.0
    %1067 = vmatpush1.msra.mxu0 0.0
    %1068 = vmatprep.subr.mxu0 0.0
    %1069 = vmatpush1.msra.mxu0 0.0
    %1070 = vmatprep.subr.mxu0 0.0
    %1071 = vmatpush1.msra.mxu0 0.0
    %1072 = vmatprep.subr.mxu0 0.0
    %1073 = vmatpush1.msra.mxu0 0.0
    %1074 = vmatprep.subr.mxu0 0.0
    %1075 = vmatpush1.msra.mxu0 0.0
    %1076 = vmatprep.subr.mxu0 0.0
    %1077 = vmatpush1.msra.mxu0 0.0
    %1078 = vmatprep.subr.mxu0 0.0
    %1079 = vmatpush1.msra.mxu0 0.0
    %1080 = vmatprep.subr.mxu0 0.0
    %1081 = vmatpush1.msra.mxu0 0.0
    %1082 = vmatprep.subr.mxu0 0.0
    %1083 = vmatpush1.msra.mxu0 0.0
    %1084 = vmatprep.subr.mxu0 0.0
    %1085 = vmatpush1.msra.mxu0 0.0
    %1086 = vmatprep.subr.mxu0 0.0
    %1087 = vmatpush1.msra.mxu0 0.0
    %1088 = vmatprep.subr.mxu0 0.0
    %1089 = vmatpush1.msra.mxu0 0.0
    %1090 = vmatprep.subr.mxu0 0.0
    %1091 = vmatpush1.msra.mxu0 0.0
    %1092 = vmatprep.subr.mxu0 0.0
    %1093 = vmatpush1.msra.mxu0 0.0
    %1094 = vmatprep.subr.mxu0 0.0
    %1095 = vmatpush1.msra.mxu0 0.0
    %1096 = vmatprep.subr.mxu0 0.0
    %1097 = vmatpush1.msra.mxu0 0.0
    %1098 = vmatprep.subr.mxu0 0.0
    %1099 = vmatpush1.msra.mxu0 0.0
    %1100 = vmatprep.subr.mxu0 0.0
    %1101 = vmatpush1.msra.mxu0 0.0
    %1102 = vmatprep.subr.mxu0 0.0
    %1103 = vmatpush1.msra.mxu0 0.0
    %1104 = vmatprep.mubr.f32.mxu0 0.0
    %1105 = vmatmul.mubr.f32.gmra.mrb[0].mxu0 %v64
    %v1106 = vpop.f32.mrb[0].mxu0
    %v1107 = vadd.f32 0.0, %v1106
    %v1108 = vpop.f32.mrb[0].mxu0
    %1109 = vmatprep.mubr.f32.mxu0 0.0
    %1110 = vmatmul.mubr.f32.gmra.mrb[0].mxu0 %v67
    %v1111 = vpop.f32.mrb[0].mxu0
    %v1112 = vadd.f32 0.0, %v1111
    %v1113 = vpop.f32.mrb[0].mxu0
    %1114 = vdwg.mxu0
    %v1116 = vsel %vm62, %v1107, 0
    %v1119 = vsel %vm62, %v1112, 0
    %1121 = vmatprep.subr.mxu0 0.0
    %1122 = vmatpush1.msra.mxu0 %v58
    %1123 = vmatprep.subr.mxu0 0.0
    %1124 = vmatpush1.msra.mxu0 %v59
    %1125 = vmatprep.subr.mxu0 0.0
    %1126 = vmatpush1.msra.mxu0 0.0
    %1127 = vmatprep.subr.mxu0 0.0
    %1128 = vmatpush1.msra.mxu0 0.0
    %1129 = vmatprep.subr.mxu0 0.0
    %1130 = vmatpush1.msra.mxu0 0.0
    %1131 = vmatprep.subr.mxu0 0.0
    %1132 = vmatpush1.msra.mxu0 0.0
    %1133 = vmatprep.subr.mxu0 0.0
    %1134 = vmatpush1.msra.mxu0 0.0
    %1135 = vmatprep.subr.mxu0 0.0
    %1136 = vmatpush1.msra.mxu0 0.0
    %1137 = vmatprep.subr.mxu0 0.0
    %1138 = vmatpush1.msra.mxu0 0.0
    %1139 = vmatprep.subr.mxu0 0.0
    %1140 = vmatpush1.msra.mxu0 0.0
    %1141 = vmatprep.subr.mxu0 0.0
    %1142 = vmatpush1.msra.mxu0 0.0
    %1143 = vmatprep.subr.mxu0 0.0
    %1144 = vmatpush1.msra.mxu0 0.0
    %1145 = vmatprep.subr.mxu0 0.0
    %1146 = vmatpush1.msra.mxu0 0.0
    %1147 = vmatprep.subr.mxu0 0.0
    %1148 = vmatpush1.msra.mxu0 0.0
    %1149 = vmatprep.subr.mxu0 0.0
    %1150 = vmatpush1.msra.mxu0 0.0
    %1151 = vmatprep.subr.mxu0 0.0
    %1152 = vmatpush1.msra.mxu0 0.0
    %1153 = vmatprep.subr.mxu0 0.0
    %1154 = vmatpush1.msra.mxu0 0.0
    %1155 = vmatprep.subr.mxu0 0.0
    %1156 = vmatpush1.msra.mxu0 0.0
    %1157 = vmatprep.subr.mxu0 0.0
    %1158 = vmatpush1.msra.mxu0 0.0
    %1159 = vmatprep.subr.mxu0 0.0
    %1160 = vmatpush1.msra.mxu0 0.0
    %1161 = vmatprep.subr.mxu0 0.0
    %1162 = vmatpush1.msra.mxu0 0.0
    %1163 = vmatprep.subr.mxu0 0.0
    %1164 = vmatpush1.msra.mxu0 0.0
    %1165 = vmatprep.subr.mxu0 0.0
    %1166 = vmatpush1.msra.mxu0 0.0
    %1167 = vmatprep.subr.mxu0 0.0
    %1168 = vmatpush1.msra.mxu0 0.0
    %1169 = vmatprep.subr.mxu0 0.0
    %1170 = vmatpush1.msra.mxu0 0.0
    %1171 = vmatprep.subr.mxu0 0.0
    %1172 = vmatpush1.msra.mxu0 0.0
    %1173 = vmatprep.subr.mxu0 0.0
    %1174 = vmatpush1.msra.mxu0 0.0
    %1175 = vmatprep.subr.mxu0 0.0
    %1176 = vmatpush1.msra.mxu0 0.0
    %1177 = vmatprep.subr.mxu0 0.0
    %1178 = vmatpush1.msra.mxu0 0.0
    %1179 = vmatprep.subr.mxu0 0.0
    %1180 = vmatpush1.msra.mxu0 0.0
    %1181 = vmatprep.subr.mxu0 0.0
    %1182 = vmatpush1.msra.mxu0 0.0
    %1183 = vmatprep.subr.mxu0 0.0
    %1184 = vmatpush1.msra.mxu0 0.0
    %1185 = vmatprep.mubr.f32.mxu0 0.0
    %1186 = vmatmul.mubr.f32.gmra.mrb[0].mxu0 %v1116
    %v1187 = vpop.f32.mrb[0].mxu0
    %v1188 = vadd.f32 0.0, %v1187
    %v1189 = vpop.f32.mrb[0].mxu0
    %1190 = vmatprep.mubr.f32.mxu0 0.0
    %1191 = vmatmul.mubr.f32.gmra.mrb[0].mxu0 %v1119
    %v1192 = vpop.f32.mrb[0].mxu0
    %v1193 = vadd.f32 0.0, %v1192
    %v1194 = vpop.f32.mrb[0].mxu0
    %1195 = vdwg.mxu0
    %s1196 = scalar_lea.vmem [#allocation8], 96
    %1197 = vst [vmem:[%s1196] sm:$0xff] %v1188
    %1198 = vst [vmem:[%s1196 + $0x8] sm:$0xff] %v1193
    %s1199 = scalar_lea.vmem [#allocation7], 112
    %v1200 = vld [vmem:[%s1199] sm:$0xff]
    %v1201 = vld [vmem:[%s1199 + $0x8] sm:$0xff]
    %1202 = vmatprep.subr.mxu0 0.0
    %1203 = vmatpush1.msra.mxu0 %v1200
    %1204 = vmatprep.subr.mxu0 0.0
    %1205 = vmatpush1.msra.mxu0 %v1201
    %1206 = vmatprep.subr.mxu0 0.0
    %1207 = vmatpush1.msra.mxu0 0.0
    %1208 = vmatprep.subr.mxu0 0.0
    %1209 = vmatpush1.msra.mxu0 0.0
    %1210 = vmatprep.subr.mxu0 0.0
    %1211 = vmatpush1.msra.mxu0 0.0
    %1212 = vmatprep.subr.mxu0 0.0
    %1213 = vmatpush1.msra.mxu0 0.0
    %1214 = vmatprep.subr.mxu0 0.0
    %1215 = vmatpush1.msra.mxu0 0.0
    %1216 = vmatprep.subr.mxu0 0.0
    %1217 = vmatpush1.msra.mxu0 0.0
    %1218 = vmatprep.subr.mxu0 0.0
    %1219 = vmatpush1.msra.mxu0 0.0
    %1220 = vmatprep.subr.mxu0 0.0
    %1221 = vmatpush1.msra.mxu0 0.0
    %1222 = vmatprep.subr.mxu0 0.0
    %1223 = vmatpush1.msra.mxu0 0.0
    %1224 = vmatprep.subr.mxu0 0.0
    %1225 = vmatpush1.msra.mxu0 0.0
    %1226 = vmatprep.subr.mxu0 0.0
    %1227 = vmatpush1.msra.mxu0 0.0
    %1228 = vmatprep.subr.mxu0 0.0
    %1229 = vmatpush1.msra.mxu0 0.0
    %1230 = vmatprep.subr.mxu0 0.0
    %1231 = vmatpush1.msra.mxu0 0.0
    %1232 = vmatprep.subr.mxu0 0.0
    %1233 = vmatpush1.msra.mxu0 0.0
    %1234 = vmatprep.subr.mxu0 0.0
    %1235 = vmatpush1.msra.mxu0 0.0
    %1236 = vmatprep.subr.mxu0 0.0
    %1237 = vmatpush1.msra.mxu0 0.0
    %1238 = vmatprep.subr.mxu0 0.0
    %1239 = vmatpush1.msra.mxu0 0.0
    %1240 = vmatprep.subr.mxu0 0.0
    %1241 = vmatpush1.msra.mxu0 0.0
    %1242 = vmatprep.subr.mxu0 0.0
    %1243 = vmatpush1.msra.mxu0 0.0
    %1244 = vmatprep.subr.mxu0 0.0
    %1245 = vmatpush1.msra.mxu0 0.0
    %1246 = vmatprep.subr.mxu0 0.0
    %1247 = vmatpush1.msra.mxu0 0.0
    %1248 = vmatprep.subr.mxu0 0.0
    %1249 = vmatpush1.msra.mxu0 0.0
    %1250 = vmatprep.subr.mxu0 0.0
    %1251 = vmatpush1.msra.mxu0 0.0
    %1252 = vmatprep.subr.mxu0 0.0
    %1253 = vmatpush1.msra.mxu0 0.0
    %1254 = vmatprep.subr.mxu0 0.0
    %1255 = vmatpush1.msra.mxu0 0.0
    %1256 = vmatprep.subr.mxu0 0.0
    %1257 = vmatpush1.msra.mxu0 0.0
    %1258 = vmatprep.subr.mxu0 0.0
    %1259 = vmatpush1.msra.mxu0 0.0
    %1260 = vmatprep.subr.mxu0 0.0
    %1261 = vmatpush1.msra.mxu0 0.0
    %1262 = vmatprep.subr.mxu0 0.0
    %1263 = vmatpush1.msra.mxu0 0.0
    %1264 = vmatprep.subr.mxu0 0.0
    %1265 = vmatpush1.msra.mxu0 0.0
    %1266 = vmatprep.mubr.f32.mxu0 0.0
    %1267 = vmatmul.mubr.f32.gmra.mrb[0].mxu0 %v64
    %v1268 = vpop.f32.mrb[0].mxu0
    %v1269 = vadd.f32 0.0, %v1268
    %v1270 = vpop.f32.mrb[0].mxu0
    %1271 = vmatprep.mubr.f32.mxu0 0.0
    %1272 = vmatmul.mubr.f32.gmra.mrb[0].mxu0 %v67
    %v1273 = vpop.f32.mrb[0].mxu0
    %v1274 = vadd.f32 0.0, %v1273
    %v1275 = vpop.f32.mrb[0].mxu0
    %1276 = vdwg.mxu0
    %v1278 = vsel %vm62, %v1269, 0
    %v1281 = vsel %vm62, %v1274, 0
    %1283 = vmatprep.subr.mxu0 0.0
    %1284 = vmatpush1.msra.mxu0 %v58
    %1285 = vmatprep.subr.mxu0 0.0
    %1286 = vmatpush1.msra.mxu0 %v59
    %1287 = vmatprep.subr.mxu0 0.0
    %1288 = vmatpush1.msra.mxu0 0.0
    %1289 = vmatprep.subr.mxu0 0.0
    %1290 = vmatpush1.msra.mxu0 0.0
    %1291 = vmatprep.subr.mxu0 0.0
    %1292 = vmatpush1.msra.mxu0 0.0
    %1293 = vmatprep.subr.mxu0 0.0
    %1294 = vmatpush1.msra.mxu0 0.0
    %1295 = vmatprep.subr.mxu0 0.0
    %1296 = vmatpush1.msra.mxu0 0.0
    %1297 = vmatprep.subr.mxu0 0.0
    %1298 = vmatpush1.msra.mxu0 0.0
    %1299 = vmatprep.subr.mxu0 0.0
    %1300 = vmatpush1.msra.mxu0 0.0
    %1301 = vmatprep.subr.mxu0 0.0
    %1302 = vmatpush1.msra.mxu0 0.0
    %1303 = vmatprep.subr.mxu0 0.0
    %1304 = vmatpush1.msra.mxu0 0.0
    %1305 = vmatprep.subr.mxu0 0.0
    %1306 = vmatpush1.msra.mxu0 0.0
    %1307 = vmatprep.subr.mxu0 0.0
    %1308 = vmatpush1.msra.mxu0 0.0
    %1309 = vmatprep.subr.mxu0 0.0
    %1310 = vmatpush1.msra.mxu0 0.0
    %1311 = vmatprep.subr.mxu0 0.0
    %1312 = vmatpush1.msra.mxu0 0.0
    %1313 = vmatprep.subr.mxu0 0.0
    %1314 = vmatpush1.msra.mxu0 0.0
    %1315 = vmatprep.subr.mxu0 0.0
    %1316 = vmatpush1.msra.mxu0 0.0
    %1317 = vmatprep.subr.mxu0 0.0
    %1318 = vmatpush1.msra.mxu0 0.0
    %1319 = vmatprep.subr.mxu0 0.0
    %1320 = vmatpush1.msra.mxu0 0.0
    %1321 = vmatprep.subr.mxu0 0.0
    %1322 = vmatpush1.msra.mxu0 0.0
    %1323 = vmatprep.subr.mxu0 0.0
    %1324 = vmatpush1.msra.mxu0 0.0
    %1325 = vmatprep.subr.mxu0 0.0
    %1326 = vmatpush1.msra.mxu0 0.0
    %1327 = vmatprep.subr.mxu0 0.0
    %1328 = vmatpush1.msra.mxu0 0.0
    %1329 = vmatprep.subr.mxu0 0.0
    %1330 = vmatpush1.msra.mxu0 0.0
    %1331 = vmatprep.subr.mxu0 0.0
    %1332 = vmatpush1.msra.mxu0 0.0
    %1333 = vmatprep.subr.mxu0 0.0
    %1334 = vmatpush1.msra.mxu0 0.0
    %1335 = vmatprep.subr.mxu0 0.0
    %1336 = vmatpush1.msra.mxu0 0.0
    %1337 = vmatprep.subr.mxu0 0.0
    %1338 = vmatpush1.msra.mxu0 0.0
    %1339 = vmatprep.subr.mxu0 0.0
    %1340 = vmatpush1.msra.mxu0 0.0
    %1341 = vmatprep.subr.mxu0 0.0
    %1342 = vmatpush1.msra.mxu0 0.0
    %1343 = vmatprep.subr.mxu0 0.0
    %1344 = vmatpush1.msra.mxu0 0.0
    %1345 = vmatprep.subr.mxu0 0.0
    %1346 = vmatpush1.msra.mxu0 0.0
    %1347 = vmatprep.mubr.f32.mxu0 0.0
    %1348 = vmatmul.mubr.f32.gmra.mrb[0].mxu0 %v1278
    %v1349 = vpop.f32.mrb[0].mxu0
    %v1350 = vadd.f32 0.0, %v1349
    %v1351 = vpop.f32.mrb[0].mxu0
    %1352 = vmatprep.mubr.f32.mxu0 0.0
    %1353 = vmatmul.mubr.f32.gmra.mrb[0].mxu0 %v1281
    %v1354 = vpop.f32.mrb[0].mxu0
    %v1355 = vadd.f32 0.0, %v1354
    %v1356 = vpop.f32.mrb[0].mxu0
    %1357 = vdwg.mxu0
    %s1358 = scalar_lea.vmem [#allocation8], 112
    %1359 = vst [vmem:[%s1358] sm:$0xff] %v1350
    %1360 = vst [vmem:[%s1358 + $0x8] sm:$0xff] %v1355
    // Predicated region
    $region26: #{tpu_custom_call.1} parent=1 // pred_check
      _
    $region27: #{tpu_custom_call.1} parent=1 // pred_check_branch
      %1362 = sbr.rel (0) target = $region29
    $region28: #{tpu_custom_call.1} parent=1 // pred_region
      %s1364 = ssub.s32 2048, 2048
      %1365 = vsyncadd [#allocation4], %s1364
      %s1366 = sshll.u32 [#allocation8], 4
      %s1367 = int_to_ptr.vmem [resolvable:$true] %s1366
      %1372 = dma.vmem_to_hbm [thread:$0]  %s1367, 2048, %s3, [#allocation4], 128, 128, 8
    $region29: #{tpu_custom_call.1} parent=1 // pred_fallthru
      _
    // Predicated region
    $region30: #{tpu_custom_call.1} parent=1 // pred_check
      _
    $region31: #{tpu_custom_call.1} parent=1 // pred_check_branch
      %1374 = sbr.rel (0) target = $region33
    $region32: #{tpu_custom_call.1} parent=1 // pred_region
      %1375 = dma.done [#allocation4], 2048
    $region33: #{tpu_custom_call.1} parent=1 // pred_fallthru
      _
    %1376 = vsyncpa [#allocation3], 1
    %1377 = vsyncpa [#allocation6], 1
    %1378 = vsyncpa [#allocation4], 1

</llo_original>
